<compile_context>
chip_gen: v5e
topology: v5e:2x2
jax: 0.10.0
libtpu: 0.0.40
codegen_flags: <defaults>
</compile_context>

<pallas_src>
import functools

import jax
import jax.numpy as jnp
import numpy as np
from jax.experimental import pallas as pl
from jax.experimental.pallas import tpu as pltpu


# ----------------------------------------------------------------------------
# Fused per-batch kernel
# ----------------------------------------------------------------------------
def _channel_attn_kernel(xg_ref, x_ref, wkv_t_ref, wq_bd_ref, wp_t_ref, bp_ref,
                         o_ref, y_scr, *, num_heads, num_group, scale):
    H, G = num_heads, num_group
    H2 = H // G
    _, n, c = x_ref.shape
    hd = c // H
    nr = n // H                      # output rows contributed per (h2, g) block

    x = x_ref[0]                     # (n, c)
    xg = xg_ref[0]                   # (nr, H*c)  -- x rows packed H per row

    # Fused K/V projection: one (n, c) @ (c, 2c) matmul.
    kv = jnp.dot(x, wkv_t_ref[...], preferred_element_type=jnp.float32)
    k_all = kv[:, :c]                # (n, c)
    v_all = kv[:, c:]                # (n, c)

    # All heads' transposed attention logits at once:
    #   s_big[i, j] = scale * sum_n v_all[n, i] * k_all[n, j]
    # The per-head logits^T are the hd x hd diagonal blocks.
    s_big = jnp.dot(v_all.T, k_all, preferred_element_type=jnp.float32) * scale

    # Per-group query, produced directly in the scrambled layout:
    #   qr[g][r, m*hd + d] == q_g[r*H + m, d]
    qr = [jnp.dot(xg, wq_bd_ref[g], preferred_element_type=jnp.float32)
          for g in range(G)]         # each (nr, c)

    # idx enumerates (h2, g) blocks in the order produced by x5.transpose(1,2);
    # block idx fills output rows [idx*nr, (idx+1)*nr) of the pre-proj tensor.
    for idx in range(H):
        h2, g = idx // G, idx % G
        head = g * H2 + h2                       # column block of kv_lin
        lo, hi = head * hd, (head + 1) * hd

        # attn^T = softmax over the leading axis of logits^T (no transpose of
        # the softmax result is ever needed).
        s_t = s_big[lo:hi, lo:hi]                              # (hd, hd)
        s_t = s_t - jnp.max(s_t, axis=0, keepdims=True)
        p = jnp.exp(s_t)
        at = p * pl.reciprocal(jnp.sum(p, axis=0, keepdims=True), approx=True)

        # Y_scram[idx*nr + r, m*hd + d] = sum_{d'} q_g[r*H+m, d'] * attn[d, d']
        #                               = (qr[g][:, m-block] @ attn^T)[r, d]
        for m in range(H):
            qs = qr[g][:, m * hd:(m + 1) * hd]                 # (nr, hd)
            y_scr[idx * nr:(idx + 1) * nr, m * hd:(m + 1) * hd] = jnp.dot(
                qs, at, preferred_element_type=jnp.float32)

    # Output projection + bias, single full (n, c) store.
    o_ref[0] = (jnp.dot(y_scr[...], wp_t_ref[...],
                        preferred_element_type=jnp.float32) + bp_ref[...])


# ----------------------------------------------------------------------------
# Host wrapper
# ----------------------------------------------------------------------------
def channel_attention_forward(x, params, *, num_heads, num_group=2):
    b, n, c = x.shape
    H, G = num_heads, num_group
    assert c % H == 0 and H % G == 0
    assert n % H == 0  # see TODO above
    hd = c // H
    nr = n // H
    scale = hd ** (-0.5)

    Wq, Wkv, Wp, bp = params["Wq"], params["Wkv"], params["Wp"], params["bp"]

    # Host-side weight prep (would be done once at init in a real model).
    wkv_t = jnp.transpose(Wkv)                       # (c, 2c)
    wp_t = jnp.transpose(Wp)                         # (c, c)
    wq_t = jnp.transpose(Wq)                         # (c, G*hd)
    eye_h = jnp.eye(H, dtype=x.dtype)
    # Block-diagonal query weights: wq_bd[g] = kron(I_H, Wq_g.T), (H*c, c).
    wq_bd = jnp.stack(
        [jnp.kron(eye_h, wq_t[:, g * hd:(g + 1) * hd]) for g in range(G)],
        axis=0)                                      # (G, H*c, c)
    x_g = x.reshape(b, nr, H * c)                    # free contiguous reshape
    bp2 = bp.reshape(1, c)

    kernel = functools.partial(_channel_attn_kernel, num_heads=H,
                               num_group=G, scale=scale)
    return pl.pallas_call(
        kernel,
        out_shape=jax.ShapeDtypeStruct((b, n, c), jnp.float32),
        grid_spec=pltpu.PrefetchScalarGridSpec(
            num_scalar_prefetch=0,
            grid=(b,),
            in_specs=[
                pl.BlockSpec((1, nr, H * c), lambda bi: (bi, 0, 0)),
                pl.BlockSpec((1, n, c), lambda bi: (bi, 0, 0)),
                pl.BlockSpec((c, 2 * c), lambda bi: (0, 0)),
                pl.BlockSpec((G, H * c, c), lambda bi: (0, 0, 0)),
                pl.BlockSpec((c, c), lambda bi: (0, 0)),
                pl.BlockSpec((1, c), lambda bi: (0, 0)),
            ],
            out_specs=pl.BlockSpec((1, n, c), lambda bi: (bi, 0, 0)),
            scratch_shapes=[pltpu.VMEM((n, c), jnp.float32)],
        ),
        compiler_params=pltpu.CompilerParams(
            dimension_semantics=("parallel",)),
    )(x_g, x, wkv_t, wq_bd, wp_t, bp2)


# ----------------------------------------------------------------------------
# Pure-JAX reference (direct transcription of the torch GKVA forward)
# ----------------------------------------------------------------------------
def reference_forward(x, params, *, num_heads, num_group=2):
    b, n, c = x.shape
    H, G = num_heads, num_group
    hd = c // H
    H2 = H // G
    scale = hd ** (-0.5)
    Wq, Wkv, Wp, bp = params["Wq"], params["Wkv"], params["Wp"], params["bp"]

    q = jnp.transpose((x @ Wq.T).reshape(b, 1, n, G, hd), (0, 3, 1, 2, 4))
    kv = jnp.transpose((x @ Wkv.T).reshape(b, n, 2, G, H2, hd),
                       (2, 0, 3, 4, 1, 5))
    k, v = kv[0], kv[1]                                  # (b, G, H2, n, hd)
    k = k * scale
    attn = jnp.swapaxes(k, -1, -2) @ v                   # (b, G, H2, hd, hd)
    attn = jax.nn.softmax(attn, axis=-1)
    xo = jnp.swapaxes(attn @ jnp.swapaxes(q, -1, -2), -1, -2)  # (b,G,H2,n,hd)
    xo = jnp.swapaxes(xo, 1, 2).reshape(b, n, c)
    return xo @ Wp.T + bp


if __name__ == "__main__":
    # Small shapes consistent with the module: dim=32, num_heads=4, 64 tokens.
    b, c = 2, 32
    num_heads, num_group = 4, 2      # ChannelAttention(dim=32, num_heads=4)
    n = 64
    hd = c // num_heads

    key = jax.random.PRNGKey(0)
    kx, kq, kkv, kp, kb = jax.random.split(key, 5)
    x = jax.random.normal(kx, (b, n, c), dtype=jnp.float32)

    # nn.Linear weight shapes: (out_features, in_features); q/kv have no bias.
    params = {
        "Wq": 0.02 * jax.random.normal(kq, (hd * num_group, c), dtype=jnp.float32),
        "Wkv": 0.02 * jax.random.normal(kkv, (2 * c, c), dtype=jnp.float32),
        "Wp": 0.02 * jax.random.normal(kp, (c, c), dtype=jnp.float32),
        "bp": 0.02 * jax.random.normal(kb, (c,), dtype=jnp.float32),
    }

    out = channel_attention_forward(x, params, num_heads=num_heads,
                                    num_group=num_group)
    out = jax.block_until_ready(out)

    ref = reference_forward(x, params, num_heads=num_heads,
                            num_group=num_group)
    np.testing.assert_allclose(np.asarray(out), np.asarray(ref),
                               rtol=5e-3, atol=5e-4)

    print("KERNEL_OK")
</pallas_src>

<mosaic_0001>
module attributes {stable_mosaic.version = 11 : i64} {
  func.func @_channel_attn_kernel(%arg0: i32, %arg1: memref<1x16x128xf32, #tpu.memory_space<vmem>>, %arg2: memref<1x64x32xf32, #tpu.memory_space<vmem>>, %arg3: memref<32x64xf32, #tpu.memory_space<vmem>>, %arg4: memref<2x128x32xf32, #tpu.memory_space<vmem>>, %arg5: memref<32x32xf32, #tpu.memory_space<vmem>>, %arg6: memref<1x32xf32, #tpu.memory_space<vmem>>, %arg7: memref<1x64x32xf32, #tpu.memory_space<vmem>>, %arg8: memref<64x32xf32, #tpu.memory_space<vmem>>) attributes {dimension_semantics = [#tpu.dimension_semantics<parallel>], iteration_bounds = array<i64: 2>, scalar_prefetch = 0 : i64, scratch_operands = 1 : i64, tpu.core_type = #tpu.core_type<tc>, window_params = [{transform_indices = @transform_0, window_bounds = array<i64: 1, 16, 128>}, {transform_indices = @transform_1, window_bounds = array<i64: 1, 64, 32>}, {pipeline_mode = #tpu.pipeline_mode<synchronous>, transform_indices = @transform_2, window_bounds = array<i64: 32, 64>}, {pipeline_mode = #tpu.pipeline_mode<synchronous>, transform_indices = @transform_3, window_bounds = array<i64: 2, 128, 32>}, {pipeline_mode = #tpu.pipeline_mode<synchronous>, transform_indices = @transform_4, window_bounds = array<i64: 32, 32>}, {pipeline_mode = #tpu.pipeline_mode<synchronous>, transform_indices = @transform_5, window_bounds = array<i64: 1, 32>}, {transform_indices = @transform_6, window_bounds = array<i64: 1, 64, 32>}]} {
    %c0 = arith.constant 0 : index
    %c0_0 = arith.constant 0 : index
    %c0_1 = arith.constant 0 : index
    %0 = vector.load %arg2[%c0, %c0_0, %c0_1] : memref<1x64x32xf32, #tpu.memory_space<vmem>>, vector<1x64x32xf32>
    %1 = vector.shape_cast %0 : vector<1x64x32xf32> to vector<64x32xf32>
    %c0_2 = arith.constant 0 : index
    %c0_3 = arith.constant 0 : index
    %c0_4 = arith.constant 0 : index
    %2 = vector.load %arg1[%c0_2, %c0_3, %c0_4] : memref<1x16x128xf32, #tpu.memory_space<vmem>>, vector<1x16x128xf32>
    %3 = vector.shape_cast %2 : vector<1x16x128xf32> to vector<16x128xf32>
    %c0_5 = arith.constant 0 : index
    %c0_6 = arith.constant 0 : index
    %4 = vector.load %arg3[%c0_5, %c0_6] : memref<32x64xf32, #tpu.memory_space<vmem>>, vector<32x64xf32>
    %cst = arith.constant dense<0.000000e+00> : vector<64x64xf32>
    %5 = tpu.matmul %1, %4, %cst {dimension_numbers = #tpu.dot_dimension_numbers<[1], [0], [0], [1], [0, 0, 1, 1], [], []>} : vector<64x32xf32>, vector<32x64xf32>, vector<64x64xf32> -> vector<64x64xf32>
    %6 = vector.extract_strided_slice %5 {offsets = [0, 0], sizes = [64, 32], strides = [1, 1]} : vector<64x64xf32> to vector<64x32xf32>
    %7 = vector.extract_strided_slice %5 {offsets = [0, 32], sizes = [64, 32], strides = [1, 1]} : vector<64x64xf32> to vector<64x32xf32>
    %8 = tpu.transpose %7, [1, 0] : vector<64x32xf32> -> vector<32x64xf32>
    %cst_7 = arith.constant dense<0.000000e+00> : vector<32x32xf32>
    %9 = tpu.matmul %8, %6, %cst_7 {dimension_numbers = #tpu.dot_dimension_numbers<[1], [0], [0], [1], [0, 0, 1, 1], [], []>} : vector<32x64xf32>, vector<64x32xf32>, vector<32x32xf32> -> vector<32x32xf32>
    %cst_8 = arith.constant 0.353553385 : f32
    %10 = vector.broadcast %cst_8 : f32 to vector<32x32xf32>
    %11 = arith.mulf %9, %10 : vector<32x32xf32>
    %c0_9 = arith.constant 0 : index
    %c0_10 = arith.constant 0 : index
    %c0_11 = arith.constant 0 : index
    %12 = vector.load %arg4[%c0_9, %c0_10, %c0_11] : memref<2x128x32xf32, #tpu.memory_space<vmem>>, vector<1x128x32xf32>
    %13 = vector.shape_cast %12 : vector<1x128x32xf32> to vector<128x32xf32>
    %cst_12 = arith.constant dense<0.000000e+00> : vector<16x32xf32>
    %14 = tpu.matmul %3, %13, %cst_12 {dimension_numbers = #tpu.dot_dimension_numbers<[1], [0], [0], [1], [0, 0, 1, 1], [], []>} : vector<16x128xf32>, vector<128x32xf32>, vector<16x32xf32> -> vector<16x32xf32>
    %c1 = arith.constant 1 : index
    %c0_13 = arith.constant 0 : index
    %c0_14 = arith.constant 0 : index
    %15 = vector.load %arg4[%c1, %c0_13, %c0_14] : memref<2x128x32xf32, #tpu.memory_space<vmem>>, vector<1x128x32xf32>
    %16 = vector.shape_cast %15 : vector<1x128x32xf32> to vector<128x32xf32>
    %cst_15 = arith.constant dense<0.000000e+00> : vector<16x32xf32>
    %17 = tpu.matmul %3, %16, %cst_15 {dimension_numbers = #tpu.dot_dimension_numbers<[1], [0], [0], [1], [0, 0, 1, 1], [], []>} : vector<16x128xf32>, vector<128x32xf32>, vector<16x32xf32> -> vector<16x32xf32>
    %18 = vector.extract_strided_slice %11 {offsets = [0, 0], sizes = [8, 8], strides = [1, 1]} : vector<32x32xf32> to vector<8x8xf32>
    %cst_16 = arith.constant dense<0xFF800000> : vector<8xf32>
    %19 = vector.multi_reduction <maximumf>, %18, %cst_16 [0] : vector<8x8xf32> to vector<8xf32>
    %20 = vector.shape_cast %19 : vector<8xf32> to vector<1x8xf32>
    %21 = vector.broadcast %20 : vector<1x8xf32> to vector<8x8xf32>
    %22 = arith.subf %18, %21 : vector<8x8xf32>
    %23 = math.exp %22 : vector<8x8xf32>
    %cst_17 = arith.constant dense<0.000000e+00> : vector<8xf32>
    %24 = vector.multi_reduction <add>, %23, %cst_17 [0] : vector<8x8xf32> to vector<8xf32>
    %25 = vector.shape_cast %24 : vector<8xf32> to vector<1x8xf32>
    %26 = tpu.reciprocal %25 {approx = true} : vector<1x8xf32> -> vector<1x8xf32>
    %27 = vector.broadcast %26 : vector<1x8xf32> to vector<8x8xf32>
    %28 = arith.mulf %23, %27 : vector<8x8xf32>
    %29 = vector.extract_strided_slice %14 {offsets = [0, 0], sizes = [16, 8], strides = [1, 1]} : vector<16x32xf32> to vector<16x8xf32>
    %cst_18 = arith.constant dense<0.000000e+00> : vector<16x8xf32>
    %30 = tpu.matmul %29, %28, %cst_18 {dimension_numbers = #tpu.dot_dimension_numbers<[1], [0], [0], [1], [0, 0, 1, 1], [], []>} : vector<16x8xf32>, vector<8x8xf32>, vector<16x8xf32> -> vector<16x8xf32>
    %c0_19 = arith.constant 0 : index
    %c0_20 = arith.constant 0 : index
    %31 = vector.load %arg8[%c0_19, %c0_20] : memref<64x32xf32, #tpu.memory_space<vmem>>, vector<16x8xf32>
    tpu.vector_store %arg8[%c0_19, %c0_20], %30 {strides = array<i32>} : memref<64x32xf32, #tpu.memory_space<vmem>>, vector<16x8xf32>,
    %32 = vector.extract_strided_slice %14 {offsets = [0, 8], sizes = [16, 8], strides = [1, 1]} : vector<16x32xf32> to vector<16x8xf32>
    %cst_21 = arith.constant dense<0.000000e+00> : vector<16x8xf32>
    %33 = tpu.matmul %32, %28, %cst_21 {dimension_numbers = #tpu.dot_dimension_numbers<[1], [0], [0], [1], [0, 0, 1, 1], [], []>} : vector<16x8xf32>, vector<8x8xf32>, vector<16x8xf32> -> vector<16x8xf32>
    %c0_22 = arith.constant 0 : index
    %c8 = arith.constant 8 : index
    %34 = vector.load %arg8[%c0_22, %c8] : memref<64x32xf32, #tpu.memory_space<vmem>>, vector<16x8xf32>
    tpu.vector_store %arg8[%c0_22, %c8], %33 {strides = array<i32>} : memref<64x32xf32, #tpu.memory_space<vmem>>, vector<16x8xf32>,
    %35 = vector.extract_strided_slice %14 {offsets = [0, 16], sizes = [16, 8], strides = [1, 1]} : vector<16x32xf32> to vector<16x8xf32>
    %cst_23 = arith.constant dense<0.000000e+00> : vector<16x8xf32>
    %36 = tpu.matmul %35, %28, %cst_23 {dimension_numbers = #tpu.dot_dimension_numbers<[1], [0], [0], [1], [0, 0, 1, 1], [], []>} : vector<16x8xf32>, vector<8x8xf32>, vector<16x8xf32> -> vector<16x8xf32>
    %c0_24 = arith.constant 0 : index
    %c16 = arith.constant 16 : index
    %37 = vector.load %arg8[%c0_24, %c16] : memref<64x32xf32, #tpu.memory_space<vmem>>, vector<16x8xf32>
    tpu.vector_store %arg8[%c0_24, %c16], %36 {strides = array<i32>} : memref<64x32xf32, #tpu.memory_space<vmem>>, vector<16x8xf32>,
    %38 = vector.extract_strided_slice %14 {offsets = [0, 24], sizes = [16, 8], strides = [1, 1]} : vector<16x32xf32> to vector<16x8xf32>
    %cst_25 = arith.constant dense<0.000000e+00> : vector<16x8xf32>
    %39 = tpu.matmul %38, %28, %cst_25 {dimension_numbers = #tpu.dot_dimension_numbers<[1], [0], [0], [1], [0, 0, 1, 1], [], []>} : vector<16x8xf32>, vector<8x8xf32>, vector<16x8xf32> -> vector<16x8xf32>
    %c0_26 = arith.constant 0 : index
    %c24 = arith.constant 24 : index
    %40 = vector.load %arg8[%c0_26, %c24] : memref<64x32xf32, #tpu.memory_space<vmem>>, vector<16x8xf32>
    tpu.vector_store %arg8[%c0_26, %c24], %39 {strides = array<i32>} : memref<64x32xf32, #tpu.memory_space<vmem>>, vector<16x8xf32>,
    %41 = vector.extract_strided_slice %11 {offsets = [16, 16], sizes = [8, 8], strides = [1, 1]} : vector<32x32xf32> to vector<8x8xf32>
    %cst_27 = arith.constant dense<0xFF800000> : vector<8xf32>
    %42 = vector.multi_reduction <maximumf>, %41, %cst_27 [0] : vector<8x8xf32> to vector<8xf32>
    %43 = vector.shape_cast %42 : vector<8xf32> to vector<1x8xf32>
    %44 = vector.broadcast %43 : vector<1x8xf32> to vector<8x8xf32>
    %45 = arith.subf %41, %44 : vector<8x8xf32>
    %46 = math.exp %45 : vector<8x8xf32>
    %cst_28 = arith.constant dense<0.000000e+00> : vector<8xf32>
    %47 = vector.multi_reduction <add>, %46, %cst_28 [0] : vector<8x8xf32> to vector<8xf32>
    %48 = vector.shape_cast %47 : vector<8xf32> to vector<1x8xf32>
    %49 = tpu.reciprocal %48 {approx = true} : vector<1x8xf32> -> vector<1x8xf32>
    %50 = vector.broadcast %49 : vector<1x8xf32> to vector<8x8xf32>
    %51 = arith.mulf %46, %50 : vector<8x8xf32>
    %52 = vector.extract_strided_slice %17 {offsets = [0, 0], sizes = [16, 8], strides = [1, 1]} : vector<16x32xf32> to vector<16x8xf32>
    %cst_29 = arith.constant dense<0.000000e+00> : vector<16x8xf32>
    %53 = tpu.matmul %52, %51, %cst_29 {dimension_numbers = #tpu.dot_dimension_numbers<[1], [0], [0], [1], [0, 0, 1, 1], [], []>} : vector<16x8xf32>, vector<8x8xf32>, vector<16x8xf32> -> vector<16x8xf32>
    %c16_30 = arith.constant 16 : index
    %c0_31 = arith.constant 0 : index
    %54 = vector.load %arg8[%c16_30, %c0_31] : memref<64x32xf32, #tpu.memory_space<vmem>>, vector<16x8xf32>
    tpu.vector_store %arg8[%c16_30, %c0_31], %53 {strides = array<i32>} : memref<64x32xf32, #tpu.memory_space<vmem>>, vector<16x8xf32>,
    %55 = vector.extract_strided_slice %17 {offsets = [0, 8], sizes = [16, 8], strides = [1, 1]} : vector<16x32xf32> to vector<16x8xf32>
    %cst_32 = arith.constant dense<0.000000e+00> : vector<16x8xf32>
    %56 = tpu.matmul %55, %51, %cst_32 {dimension_numbers = #tpu.dot_dimension_numbers<[1], [0], [0], [1], [0, 0, 1, 1], [], []>} : vector<16x8xf32>, vector<8x8xf32>, vector<16x8xf32> -> vector<16x8xf32>
    %c16_33 = arith.constant 16 : index
    %c8_34 = arith.constant 8 : index
    %57 = vector.load %arg8[%c16_33, %c8_34] : memref<64x32xf32, #tpu.memory_space<vmem>>, vector<16x8xf32>
    tpu.vector_store %arg8[%c16_33, %c8_34], %56 {strides = array<i32>} : memref<64x32xf32, #tpu.memory_space<vmem>>, vector<16x8xf32>,
    %58 = vector.extract_strided_slice %17 {offsets = [0, 16], sizes = [16, 8], strides = [1, 1]} : vector<16x32xf32> to vector<16x8xf32>
    %cst_35 = arith.constant dense<0.000000e+00> : vector<16x8xf32>
    %59 = tpu.matmul %58, %51, %cst_35 {dimension_numbers = #tpu.dot_dimension_numbers<[1], [0], [0], [1], [0, 0, 1, 1], [], []>} : vector<16x8xf32>, vector<8x8xf32>, vector<16x8xf32> -> vector<16x8xf32>
    %c16_36 = arith.constant 16 : index
    %c16_37 = arith.constant 16 : index
    %60 = vector.load %arg8[%c16_36, %c16_37] : memref<64x32xf32, #tpu.memory_space<vmem>>, vector<16x8xf32>
    tpu.vector_store %arg8[%c16_36, %c16_37], %59 {strides = array<i32>} : memref<64x32xf32, #tpu.memory_space<vmem>>, vector<16x8xf32>,
    %61 = vector.extract_strided_slice %17 {offsets = [0, 24], sizes = [16, 8], strides = [1, 1]} : vector<16x32xf32> to vector<16x8xf32>
    %cst_38 = arith.constant dense<0.000000e+00> : vector<16x8xf32>
    %62 = tpu.matmul %61, %51, %cst_38 {dimension_numbers = #tpu.dot_dimension_numbers<[1], [0], [0], [1], [0, 0, 1, 1], [], []>} : vector<16x8xf32>, vector<8x8xf32>, vector<16x8xf32> -> vector<16x8xf32>
    %c16_39 = arith.constant 16 : index
    %c24_40 = arith.constant 24 : index
    %63 = vector.load %arg8[%c16_39, %c24_40] : memref<64x32xf32, #tpu.memory_space<vmem>>, vector<16x8xf32>
    tpu.vector_store %arg8[%c16_39, %c24_40], %62 {strides = array<i32>} : memref<64x32xf32, #tpu.memory_space<vmem>>, vector<16x8xf32>,
    %64 = vector.extract_strided_slice %11 {offsets = [8, 8], sizes = [8, 8], strides = [1, 1]} : vector<32x32xf32> to vector<8x8xf32>
    %cst_41 = arith.constant dense<0xFF800000> : vector<8xf32>
    %65 = vector.multi_reduction <maximumf>, %64, %cst_41 [0] : vector<8x8xf32> to vector<8xf32>
    %66 = vector.shape_cast %65 : vector<8xf32> to vector<1x8xf32>
    %67 = vector.broadcast %66 : vector<1x8xf32> to vector<8x8xf32>
    %68 = arith.subf %64, %67 : vector<8x8xf32>
    %69 = math.exp %68 : vector<8x8xf32>
    %cst_42 = arith.constant dense<0.000000e+00> : vector<8xf32>
    %70 = vector.multi_reduction <add>, %69, %cst_42 [0] : vector<8x8xf32> to vector<8xf32>
    %71 = vector.shape_cast %70 : vector<8xf32> to vector<1x8xf32>
    %72 = tpu.reciprocal %71 {approx = true} : vector<1x8xf32> -> vector<1x8xf32>
    %73 = vector.broadcast %72 : vector<1x8xf32> to vector<8x8xf32>
    %74 = arith.mulf %69, %73 : vector<8x8xf32>
    %75 = vector.extract_strided_slice %14 {offsets = [0, 0], sizes = [16, 8], strides = [1, 1]} : vector<16x32xf32> to vector<16x8xf32>
    %cst_43 = arith.constant dense<0.000000e+00> : vector<16x8xf32>
    %76 = tpu.matmul %75, %74, %cst_43 {dimension_numbers = #tpu.dot_dimension_numbers<[1], [0], [0], [1], [0, 0, 1, 1], [], []>} : vector<16x8xf32>, vector<8x8xf32>, vector<16x8xf32> -> vector<16x8xf32>
    %c32 = arith.constant 32 : index
    %c0_44 = arith.constant 0 : index
    %77 = vector.load %arg8[%c32, %c0_44] : memref<64x32xf32, #tpu.memory_space<vmem>>, vector<16x8xf32>
    tpu.vector_store %arg8[%c32, %c0_44], %76 {strides = array<i32>} : memref<64x32xf32, #tpu.memory_space<vmem>>, vector<16x8xf32>,
    %78 = vector.extract_strided_slice %14 {offsets = [0, 8], sizes = [16, 8], strides = [1, 1]} : vector<16x32xf32> to vector<16x8xf32>
    %cst_45 = arith.constant dense<0.000000e+00> : vector<16x8xf32>
    %79 = tpu.matmul %78, %74, %cst_45 {dimension_numbers = #tpu.dot_dimension_numbers<[1], [0], [0], [1], [0, 0, 1, 1], [], []>} : vector<16x8xf32>, vector<8x8xf32>, vector<16x8xf32> -> vector<16x8xf32>
    %c32_46 = arith.constant 32 : index
    %c8_47 = arith.constant 8 : index
    %80 = vector.load %arg8[%c32_46, %c8_47] : memref<64x32xf32, #tpu.memory_space<vmem>>, vector<16x8xf32>
    tpu.vector_store %arg8[%c32_46, %c8_47], %79 {strides = array<i32>} : memref<64x32xf32, #tpu.memory_space<vmem>>, vector<16x8xf32>,
    %81 = vector.extract_strided_slice %14 {offsets = [0, 16], sizes = [16, 8], strides = [1, 1]} : vector<16x32xf32> to vector<16x8xf32>
    %cst_48 = arith.constant dense<0.000000e+00> : vector<16x8xf32>
    %82 = tpu.matmul %81, %74, %cst_48 {dimension_numbers = #tpu.dot_dimension_numbers<[1], [0], [0], [1], [0, 0, 1, 1], [], []>} : vector<16x8xf32>, vector<8x8xf32>, vector<16x8xf32> -> vector<16x8xf32>
    %c32_49 = arith.constant 32 : index
    %c16_50 = arith.constant 16 : index
    %83 = vector.load %arg8[%c32_49, %c16_50] : memref<64x32xf32, #tpu.memory_space<vmem>>, vector<16x8xf32>
    tpu.vector_store %arg8[%c32_49, %c16_50], %82 {strides = array<i32>} : memref<64x32xf32, #tpu.memory_space<vmem>>, vector<16x8xf32>,
    %84 = vector.extract_strided_slice %14 {offsets = [0, 24], sizes = [16, 8], strides = [1, 1]} : vector<16x32xf32> to vector<16x8xf32>
    %cst_51 = arith.constant dense<0.000000e+00> : vector<16x8xf32>
    %85 = tpu.matmul %84, %74, %cst_51 {dimension_numbers = #tpu.dot_dimension_numbers<[1], [0], [0], [1], [0, 0, 1, 1], [], []>} : vector<16x8xf32>, vector<8x8xf32>, vector<16x8xf32> -> vector<16x8xf32>
    %c32_52 = arith.constant 32 : index
    %c24_53 = arith.constant 24 : index
    %86 = vector.load %arg8[%c32_52, %c24_53] : memref<64x32xf32, #tpu.memory_space<vmem>>, vector<16x8xf32>
    tpu.vector_store %arg8[%c32_52, %c24_53], %85 {strides = array<i32>} : memref<64x32xf32, #tpu.memory_space<vmem>>, vector<16x8xf32>,
    %87 = vector.extract_strided_slice %11 {offsets = [24, 24], sizes = [8, 8], strides = [1, 1]} : vector<32x32xf32> to vector<8x8xf32>
    %cst_54 = arith.constant dense<0xFF800000> : vector<8xf32>
    %88 = vector.multi_reduction <maximumf>, %87, %cst_54 [0] : vector<8x8xf32> to vector<8xf32>
    %89 = vector.shape_cast %88 : vector<8xf32> to vector<1x8xf32>
    %90 = vector.broadcast %89 : vector<1x8xf32> to vector<8x8xf32>
    %91 = arith.subf %87, %90 : vector<8x8xf32>
    %92 = math.exp %91 : vector<8x8xf32>
    %cst_55 = arith.constant dense<0.000000e+00> : vector<8xf32>
    %93 = vector.multi_reduction <add>, %92, %cst_55 [0] : vector<8x8xf32> to vector<8xf32>
    %94 = vector.shape_cast %93 : vector<8xf32> to vector<1x8xf32>
    %95 = tpu.reciprocal %94 {approx = true} : vector<1x8xf32> -> vector<1x8xf32>
    %96 = vector.broadcast %95 : vector<1x8xf32> to vector<8x8xf32>
    %97 = arith.mulf %92, %96 : vector<8x8xf32>
    %98 = vector.extract_strided_slice %17 {offsets = [0, 0], sizes = [16, 8], strides = [1, 1]} : vector<16x32xf32> to vector<16x8xf32>
    %cst_56 = arith.constant dense<0.000000e+00> : vector<16x8xf32>
    %99 = tpu.matmul %98, %97, %cst_56 {dimension_numbers = #tpu.dot_dimension_numbers<[1], [0], [0], [1], [0, 0, 1, 1], [], []>} : vector<16x8xf32>, vector<8x8xf32>, vector<16x8xf32> -> vector<16x8xf32>
    %c48 = arith.constant 48 : index
    %c0_57 = arith.constant 0 : index
    %100 = vector.load %arg8[%c48, %c0_57] : memref<64x32xf32, #tpu.memory_space<vmem>>, vector<16x8xf32>
    tpu.vector_store %arg8[%c48, %c0_57], %99 {strides = array<i32>} : memref<64x32xf32, #tpu.memory_space<vmem>>, vector<16x8xf32>,
    %101 = vector.extract_strided_slice %17 {offsets = [0, 8], sizes = [16, 8], strides = [1, 1]} : vector<16x32xf32> to vector<16x8xf32>
    %cst_58 = arith.constant dense<0.000000e+00> : vector<16x8xf32>
    %102 = tpu.matmul %101, %97, %cst_58 {dimension_numbers = #tpu.dot_dimension_numbers<[1], [0], [0], [1], [0, 0, 1, 1], [], []>} : vector<16x8xf32>, vector<8x8xf32>, vector<16x8xf32> -> vector<16x8xf32>
    %c48_59 = arith.constant 48 : index
    %c8_60 = arith.constant 8 : index
    %103 = vector.load %arg8[%c48_59, %c8_60] : memref<64x32xf32, #tpu.memory_space<vmem>>, vector<16x8xf32>
    tpu.vector_store %arg8[%c48_59, %c8_60], %102 {strides = array<i32>} : memref<64x32xf32, #tpu.memory_space<vmem>>, vector<16x8xf32>,
    %104 = vector.extract_strided_slice %17 {offsets = [0, 16], sizes = [16, 8], strides = [1, 1]} : vector<16x32xf32> to vector<16x8xf32>
    %cst_61 = arith.constant dense<0.000000e+00> : vector<16x8xf32>
    %105 = tpu.matmul %104, %97, %cst_61 {dimension_numbers = #tpu.dot_dimension_numbers<[1], [0], [0], [1], [0, 0, 1, 1], [], []>} : vector<16x8xf32>, vector<8x8xf32>, vector<16x8xf32> -> vector<16x8xf32>
    %c48_62 = arith.constant 48 : index
    %c16_63 = arith.constant 16 : index
    %106 = vector.load %arg8[%c48_62, %c16_63] : memref<64x32xf32, #tpu.memory_space<vmem>>, vector<16x8xf32>
    tpu.vector_store %arg8[%c48_62, %c16_63], %105 {strides = array<i32>} : memref<64x32xf32, #tpu.memory_space<vmem>>, vector<16x8xf32>,
    %107 = vector.extract_strided_slice %17 {offsets = [0, 24], sizes = [16, 8], strides = [1, 1]} : vector<16x32xf32> to vector<16x8xf32>
    %cst_64 = arith.constant dense<0.000000e+00> : vector<16x8xf32>
    %108 = tpu.matmul %107, %97, %cst_64 {dimension_numbers = #tpu.dot_dimension_numbers<[1], [0], [0], [1], [0, 0, 1, 1], [], []>} : vector<16x8xf32>, vector<8x8xf32>, vector<16x8xf32> -> vector<16x8xf32>
    %c48_65 = arith.constant 48 : index
    %c24_66 = arith.constant 24 : index
    %109 = vector.load %arg8[%c48_65, %c24_66] : memref<64x32xf32, #tpu.memory_space<vmem>>, vector<16x8xf32>
    tpu.vector_store %arg8[%c48_65, %c24_66], %108 {strides = array<i32>} : memref<64x32xf32, #tpu.memory_space<vmem>>, vector<16x8xf32>,
    %c0_67 = arith.constant 0 : index
    %c0_68 = arith.constant 0 : index
    %110 = vector.load %arg8[%c0_67, %c0_68] : memref<64x32xf32, #tpu.memory_space<vmem>>, vector<64x32xf32>
    %c0_69 = arith.constant 0 : index
    %c0_70 = arith.constant 0 : index
    %111 = vector.load %arg5[%c0_69, %c0_70] : memref<32x32xf32, #tpu.memory_space<vmem>>, vector<32x32xf32>
    %cst_71 = arith.constant dense<0.000000e+00> : vector<64x32xf32>
    %112 = tpu.matmul %110, %111, %cst_71 {dimension_numbers = #tpu.dot_dimension_numbers<[1], [0], [0], [1], [0, 0, 1, 1], [], []>} : vector<64x32xf32>, vector<32x32xf32>, vector<64x32xf32> -> vector<64x32xf32>
    %c0_72 = arith.constant 0 : index
    %c0_73 = arith.constant 0 : index
    %113 = vector.load %arg6[%c0_72, %c0_73] : memref<1x32xf32, #tpu.memory_space<vmem>>, vector<1x32xf32>
    %114 = vector.broadcast %113 : vector<1x32xf32> to vector<64x32xf32>
    %115 = arith.addf %112, %114 : vector<64x32xf32>
    %c0_74 = arith.constant 0 : index
    %c0_75 = arith.constant 0 : index
    %c0_76 = arith.constant 0 : index
    %116 = vector.load %arg7[%c0_74, %c0_75, %c0_76] : memref<1x64x32xf32, #tpu.memory_space<vmem>>, vector<1x64x32xf32>
    %117 = vector.shape_cast %116 : vector<1x64x32xf32> to vector<64x32xf32>
    %118 = vector.shape_cast %115 : vector<64x32xf32> to vector<1x64x32xf32>
    tpu.vector_store %arg7[%c0_74, %c0_75, %c0_76], %118 {strides = array<i32>} : memref<1x64x32xf32, #tpu.memory_space<vmem>>, vector<1x64x32xf32>,
    return
  }
  func.func @transform_0(%arg0: i32) -> (i32, i32, i32) {
    %c0_i32 = arith.constant 0 : i32
    %c0_i32_0 = arith.constant 0 : i32
    %c0_i32_1 = arith.constant 0 : i32
    return %arg0, %c0_i32, %c0_i32_0 : i32, i32, i32
  }
  func.func @transform_1(%arg0: i32) -> (i32, i32, i32) {
    %c0_i32 = arith.constant 0 : i32
    %c0_i32_0 = arith.constant 0 : i32
    %c0_i32_1 = arith.constant 0 : i32
    return %arg0, %c0_i32, %c0_i32_0 : i32, i32, i32
  }
  func.func @transform_2(%arg0: i32) -> (i32, i32) {
    %c0_i32 = arith.constant 0 : i32
    %c0_i32_0 = arith.constant 0 : i32
    %c0_i32_1 = arith.constant 0 : i32
    return %c0_i32, %c0_i32_0 : i32, i32
  }
  func.func @transform_3(%arg0: i32) -> (i32, i32, i32) {
    %c0_i32 = arith.constant 0 : i32
    %c0_i32_0 = arith.constant 0 : i32
    %c0_i32_1 = arith.constant 0 : i32
    %c0_i32_2 = arith.constant 0 : i32
    return %c0_i32, %c0_i32_0, %c0_i32_1 : i32, i32, i32
  }
  func.func @transform_4(%arg0: i32) -> (i32, i32) {
    %c0_i32 = arith.constant 0 : i32
    %c0_i32_0 = arith.constant 0 : i32
    %c0_i32_1 = arith.constant 0 : i32
    return %c0_i32, %c0_i32_0 : i32, i32
  }
  func.func @transform_5(%arg0: i32) -> (i32, i32) {
    %c0_i32 = arith.constant 0 : i32
    %c0_i32_0 = arith.constant 0 : i32
    %c0_i32_1 = arith.constant 0 : i32
    return %c0_i32, %c0_i32_0 : i32, i32
  }
  func.func @transform_6(%arg0: i32) -> (i32, i32, i32) {
    %c0_i32 = arith.constant 0 : i32
    %c0_i32_0 = arith.constant 0 : i32
    %c0_i32_1 = arith.constant 0 : i32
    return %arg0, %c0_i32, %c0_i32_0 : i32, i32, i32
  }
}

</mosaic_0001>

<llo_original>
// kernel: tpu_custom_call.1
$region0: #{tpu_custom_call.1}
  #allocation0 [shape = 'u32[]', space=smem, size = 0x4, offset = 0x4, fixed_abs, tag = 'smem constant byte address 0x4 - core index']
  #allocation1 [shape = 'u32[72,128]{1,0:T(1,128)}', space=vmem, size = 0x9000, scoped, tag = 'internal scratch']
  #allocation2 [shape = 'f32[64,32]{1,0:T(8,128)}', space=vmem, size = 0x8000, scoped, tag = 'scratch operand']
  %s0 = inlined_call_operand.vmem [shape: f32[2,16,128], index: 0, kind: input, shape index: {}]
  %s1 = inlined_call_operand.vmem [shape: f32[2,64,32], index: 1, kind: input, shape index: {}]
  %s2 = inlined_call_operand.vmem [shape: f32[32,64], index: 2, kind: input, shape index: {}]
  %s3 = inlined_call_operand.vmem [shape: f32[2,128,32], index: 3, kind: input, shape index: {}]
  %s4 = inlined_call_operand.vmem [shape: f32[32,32], index: 4, kind: input, shape index: {}]
  %s5 = inlined_call_operand.vmem [shape: f32[1,32], index: 5, kind: input, shape index: {}]
  %s6 = inlined_call_operand.vmem [shape: f32[2,64,32], index: 6, kind: output, shape index: {}]
  %s7 = sld [smem:[#allocation0]]
  $region57: #{tpu_custom_call.1} parent=0
    _
  %s9 = ssub.s32 1, %s7
  %s10 = scalar_select 0, %s9, %s7
  loop: start=0, step=1, limit=4
  $region2: #{tpu_custom_call.1} parent=0 // loop_pre_header
    _
  $region3: #{tpu_custom_call.1} parent=0 // loop_header
    %s12 = sphi 0, %s16
    %p13 = scmp.ge.s32.totalorder %s12, 4
    %s22 = sphi 0, %s24
    %s25 = sphi 0, %s22
    %s26 = sphi 0, %s25
    %s42 = sphi 0, %s26
    %s48 = sphi 0, %s50
    %s51 = sphi 0, %s48
    %s52 = sphi 0, %s51
    %s68 = sphi 0, %s52
    %s72 = sphi 0, %s72
    %s74 = sphi 0, %s72
    %s75 = sphi 0, %s74
    %s89 = sphi 0, %s75
    %s93 = sphi 0, %s93
    %s95 = sphi 0, %s93
    %s96 = sphi 0, %s95
    %s110 = sphi 0, %s96
    %s114 = sphi 0, %s114
    %s116 = sphi 0, %s114
    %s117 = sphi 0, %s116
    %s131 = sphi 0, %s117
    %s135 = sphi 0, %s135
    %s137 = sphi 0, %s135
    %s138 = sphi 0, %s137
    %s152 = sphi 0, %s138
    %s158 = sphi 0, %s160
    %s161 = sphi 0, %s158
    %s162 = sphi 0, %s161
    %s178 = sphi 0, %s162
  $region4: #{tpu_custom_call.1} parent=0 // loop_header_branch
    %15 = sbr.rel (%p13) target = $region8
  $region5: #{tpu_custom_call.1} parent=0 // loop_body
    %s17 = ssub.s32 %s12, 1
    %s18 = ssub.s32 %s12, 2
    %s19 = sadd.s32 %s12, 1
    %s20 = ssub.s32 %s12, %s19
    %p21 = scmp.eq.s32.totalorder %s20, 0
    %s23 = sadd.s32 %s22, 1
    %s24 = scalar_select %p21, %s22, %s23
    %p27 = pneg %p21
    %p28 = scmp.eq.s32.totalorder %s12, 1
    %p29 = por %p27, %p28
    %p30 = scmp.ne.s32.totalorder %s22, %s25
    %p31 = scmp.eq.s32.totalorder %s12, 0
    %p32 = por %p30, %p31
    %p33 = scmp.ne.s32.totalorder %s22, %s25
    %p34 = scmp.eq.s32.totalorder %s17, 1
    %p35 = por %p33, %p34
    %p36 = scmp.ne.s32.totalorder %s25, %s26
    %p37 = scmp.eq.s32.totalorder %s17, 0
    %p38 = por %p36, %p37
    %p39 = scmp.ne.s32.totalorder %s25, %s26
    %p40 = scmp.eq.s32.totalorder %s18, 1
    %p41 = por %p39, %p40
    %p43 = scmp.ne.s32.totalorder %s26, %s42
    %p44 = scmp.eq.s32.totalorder %s18, 0
    %p45 = por %p43, %p44
    %s46 = ssub.s32 %s12, %s19
    %p47 = scmp.eq.s32.totalorder %s46, 0
    %s49 = sadd.s32 %s48, 1
    %s50 = scalar_select %p47, %s48, %s49
    %p53 = pneg %p47
    %p54 = scmp.eq.s32.totalorder %s12, 1
    %p55 = por %p53, %p54
    %p56 = scmp.ne.s32.totalorder %s48, %s51
    %p57 = scmp.eq.s32.totalorder %s12, 0
    %p58 = por %p56, %p57
    %p59 = scmp.ne.s32.totalorder %s48, %s51
    %p60 = scmp.eq.s32.totalorder %s17, 1
    %p61 = por %p59, %p60
    %p62 = scmp.ne.s32.totalorder %s51, %s52
    %p63 = scmp.eq.s32.totalorder %s17, 0
    %p64 = por %p62, %p63
    %p65 = scmp.ne.s32.totalorder %s51, %s52
    %p66 = scmp.eq.s32.totalorder %s18, 1
    %p67 = por %p65, %p66
    %p69 = scmp.ne.s32.totalorder %s52, %s68
    %p70 = scmp.eq.s32.totalorder %s18, 0
    %p71 = por %p69, %p70
    %s73 = sadd.s32 %s72, 1
    %p76 = scmp.eq.s32.totalorder %s12, 1
    %p77 = scmp.ne.s32.totalorder %s72, %s74
    %p78 = scmp.eq.s32.totalorder %s12, 0
    %p79 = por %p77, %p78
    %p80 = scmp.ne.s32.totalorder %s72, %s74
    %p81 = scmp.eq.s32.totalorder %s17, 1
    %p82 = por %p80, %p81
    %p83 = scmp.ne.s32.totalorder %s74, %s75
    %p84 = scmp.eq.s32.totalorder %s17, 0
    %p85 = por %p83, %p84
    %p86 = scmp.ne.s32.totalorder %s74, %s75
    %p87 = scmp.eq.s32.totalorder %s18, 1
    %p88 = por %p86, %p87
    %p90 = scmp.ne.s32.totalorder %s75, %s89
    %p91 = scmp.eq.s32.totalorder %s18, 0
    %p92 = por %p90, %p91
    %s94 = sadd.s32 %s93, 1
    %p97 = scmp.eq.s32.totalorder %s12, 1
    %p98 = scmp.ne.s32.totalorder %s93, %s95
    %p99 = scmp.eq.s32.totalorder %s12, 0
    %p100 = por %p98, %p99
    %p101 = scmp.ne.s32.totalorder %s93, %s95
    %p102 = scmp.eq.s32.totalorder %s17, 1
    %p103 = por %p101, %p102
    %p104 = scmp.ne.s32.totalorder %s95, %s96
    %p105 = scmp.eq.s32.totalorder %s17, 0
    %p106 = por %p104, %p105
    %p107 = scmp.ne.s32.totalorder %s95, %s96
    %p108 = scmp.eq.s32.totalorder %s18, 1
    %p109 = por %p107, %p108
    %p111 = scmp.ne.s32.totalorder %s96, %s110
    %p112 = scmp.eq.s32.totalorder %s18, 0
    %p113 = por %p111, %p112
    %s115 = sadd.s32 %s114, 1
    %p118 = scmp.eq.s32.totalorder %s12, 1
    %p119 = scmp.ne.s32.totalorder %s114, %s116
    %p120 = scmp.eq.s32.totalorder %s12, 0
    %p121 = por %p119, %p120
    %p122 = scmp.ne.s32.totalorder %s114, %s116
    %p123 = scmp.eq.s32.totalorder %s17, 1
    %p124 = por %p122, %p123
    %p125 = scmp.ne.s32.totalorder %s116, %s117
    %p126 = scmp.eq.s32.totalorder %s17, 0
    %p127 = por %p125, %p126
    %p128 = scmp.ne.s32.totalorder %s116, %s117
    %p129 = scmp.eq.s32.totalorder %s18, 1
    %p130 = por %p128, %p129
    %p132 = scmp.ne.s32.totalorder %s117, %s131
    %p133 = scmp.eq.s32.totalorder %s18, 0
    %p134 = por %p132, %p133
    %s136 = sadd.s32 %s135, 1
    %p139 = scmp.eq.s32.totalorder %s12, 1
    %p140 = scmp.ne.s32.totalorder %s135, %s137
    %p141 = scmp.eq.s32.totalorder %s12, 0
    %p142 = por %p140, %p141
    %p143 = scmp.ne.s32.totalorder %s135, %s137
    %p144 = scmp.eq.s32.totalorder %s17, 1
    %p145 = por %p143, %p144
    %p146 = scmp.ne.s32.totalorder %s137, %s138
    %p147 = scmp.eq.s32.totalorder %s17, 0
    %p148 = por %p146, %p147
    %p149 = scmp.ne.s32.totalorder %s137, %s138
    %p150 = scmp.eq.s32.totalorder %s18, 1
    %p151 = por %p149, %p150
    %p153 = scmp.ne.s32.totalorder %s138, %s152
    %p154 = scmp.eq.s32.totalorder %s18, 0
    %p155 = por %p153, %p154
    %s156 = ssub.s32 %s12, %s19
    %p157 = scmp.eq.s32.totalorder %s156, 0
    %s159 = sadd.s32 %s158, 1
    %s160 = scalar_select %p157, %s158, %s159
    %p163 = pneg %p157
    %p164 = scmp.eq.s32.totalorder %s12, 1
    %p165 = por %p163, %p164
    %p166 = scmp.ne.s32.totalorder %s158, %s161
    %p167 = scmp.eq.s32.totalorder %s12, 0
    %p168 = por %p166, %p167
    %p169 = scmp.ne.s32.totalorder %s158, %s161
    %p170 = scmp.eq.s32.totalorder %s17, 1
    %p171 = por %p169, %p170
    %p172 = scmp.ne.s32.totalorder %s161, %s162
    %p173 = scmp.eq.s32.totalorder %s17, 0
    %p174 = por %p172, %p173
    %p175 = scmp.ne.s32.totalorder %s161, %s162
    %p176 = scmp.eq.s32.totalorder %s18, 1
    %p177 = por %p175, %p176
    %p179 = scmp.ne.s32.totalorder %s162, %s178
    %p180 = scmp.eq.s32.totalorder %s18, 0
    %p181 = por %p179, %p180
    %p182 = scmp.le.s32.totalorder 1, %s12
    %p183 = scmp.lt.s32.totalorder %s12, 3
    %p184 = pnand %p182, %p183
    %p185 = pneg %p184
    // Predicated region
    $region9: #{tpu_custom_call.1} parent=5 // pred_check
      _
    $region10: #{tpu_custom_call.1} parent=5 // pred_check_branch
      %187 = sbr.rel (%p184) target = $region12
    $region11: #{tpu_custom_call.1} parent=5 // pred_region
      %s188 = ssub.s32 %s12, 1
      // Predicated region
      $region13: #{tpu_custom_call.1} parent=11 // pred_check
        %p189 = pneg %p85
      $region14: #{tpu_custom_call.1} parent=11 // pred_check_branch
        %191 = sbr.rel (%p189) target = $region16
      $region15: #{tpu_custom_call.1} parent=11 // pred_region
        _
      $region16: #{tpu_custom_call.1} parent=11 // pred_fallthru
        _
      // Predicated region
      $region17: #{tpu_custom_call.1} parent=11 // pred_check
        %p192 = pneg %p106
      $region18: #{tpu_custom_call.1} parent=11 // pred_check_branch
        %194 = sbr.rel (%p192) target = $region20
      $region19: #{tpu_custom_call.1} parent=11 // pred_region
        _
      $region20: #{tpu_custom_call.1} parent=11 // pred_fallthru
        _
      // Predicated region
      $region21: #{tpu_custom_call.1} parent=11 // pred_check
        %p195 = pneg %p127
      $region22: #{tpu_custom_call.1} parent=11 // pred_check_branch
        %197 = sbr.rel (%p195) target = $region24
      $region23: #{tpu_custom_call.1} parent=11 // pred_region
        _
      $region24: #{tpu_custom_call.1} parent=11 // pred_fallthru
        _
      // Predicated region
      $region25: #{tpu_custom_call.1} parent=11 // pred_check
        %p198 = pneg %p148
      $region26: #{tpu_custom_call.1} parent=11 // pred_check_branch
        %200 = sbr.rel (%p198) target = $region28
      $region27: #{tpu_custom_call.1} parent=11 // pred_region
        _
      $region28: #{tpu_custom_call.1} parent=11 // pred_fallthru
        _
    $region12: #{tpu_custom_call.1} parent=5 // pred_fallthru
      _
    %p201 = scmp.lt.s32.totalorder %s12, 2
    // Predicated region
    $region29: #{tpu_custom_call.1} parent=5 // pred_check
      %p202 = pneg %p201
    $region30: #{tpu_custom_call.1} parent=5 // pred_check_branch
      %204 = sbr.rel (%p202) target = $region32
    $region31: #{tpu_custom_call.1} parent=5 // pred_region
      // Predicated region
      $region33: #{tpu_custom_call.1} parent=31 // pred_check
        %p205 = pneg %p32
      $region34: #{tpu_custom_call.1} parent=31 // pred_check_branch
        %207 = sbr.rel (%p205) target = $region36
      $region35: #{tpu_custom_call.1} parent=31 // pred_region
        %p208 = scmp.lt.s32.totalorder %s12, 1
        %s209 = scalar_select %p208, %s12, 1
        %s210 = smul.addr %s209, 2
        %s211 = smul.addr %s210, 8
        %s212 = scalar_lea.vmem %s0, %s211
      $region36: #{tpu_custom_call.1} parent=31 // pred_fallthru
        _
      // Predicated region
      $region37: #{tpu_custom_call.1} parent=31 // pred_check
        %p213 = pneg %p58
      $region38: #{tpu_custom_call.1} parent=31 // pred_check_branch
        %215 = sbr.rel (%p213) target = $region40
      $region39: #{tpu_custom_call.1} parent=31 // pred_region
        %p216 = scmp.lt.s32.totalorder %s12, 1
        %s217 = scalar_select %p216, %s12, 1
        %s218 = smul.addr %s217, 8
        %s219 = smul.addr %s218, 8
        %s220 = scalar_lea.vmem %s1, %s219
      $region40: #{tpu_custom_call.1} parent=31 // pred_fallthru
        _
    $region32: #{tpu_custom_call.1} parent=5 // pred_fallthru
      _
    %p221 = scmp.le.s32.totalorder 1, %s12
    %p222 = scmp.lt.s32.totalorder %s12, 3
    %p223 = pnand %p221, %p222
    %p224 = pneg %p223
    // Predicated region
    $region41: #{tpu_custom_call.1} parent=5 // pred_check
      _
    $region42: #{tpu_custom_call.1} parent=5 // pred_check_branch
      %226 = sbr.rel (%p223) target = $region44
    $region43: #{tpu_custom_call.1} parent=5 // pred_region
      %s227 = ssub.s32 %s12, 1
      %p228 = scmp.lt.s32.totalorder %s17, 1
      %s229 = scalar_select %p228, %s17, 1
      %s230 = smul.addr %s229, 2
      %s231 = smul.addr %s230, 8
      %s232 = scalar_lea.vmem %s0, %s231
      %p233 = pneg %p38
      %p234 = pneg %p35
      %p235 = scmp.lt.s32.totalorder %s17, 1
      %s236 = scalar_select %p235, %s17, 1
      %s237 = smul.addr %s236, 8
      %s238 = smul.addr %s237, 8
      %s239 = scalar_lea.vmem %s1, %s238
      %p240 = pneg %p64
      %p241 = pneg %p61
      %p242 = pneg %p85
      %p243 = pneg %p82
      %p244 = pneg %p106
      %p245 = pneg %p103
      %p246 = pneg %p127
      %p247 = pneg %p124
      %p248 = pneg %p148
      %p249 = pneg %p145
      %p250 = pneg %p174
      %p251 = pneg %p171
      %p252 = scmp.lt.s32.totalorder %s17, 1
      %s253 = scalar_select %p252, %s17, 1
      %s254 = smul.addr %s253, 8
      %s255 = smul.addr %s254, 8
      %s256 = scalar_lea.vmem %s6, %s255
      %p257 = scmp.lt.s32.totalorder %s17, 1
      %s258 = scalar_select %p257, %s17, 1
      %s259 = smul.addr %s258, 2
      %s260 = smul.addr %s259, 8
      %s261 = scalar_lea.vmem %s0, %s260
      %p262 = scmp.lt.s32.totalorder %s17, 1
      %s263 = scalar_select %p262, %s17, 1
      %s264 = smul.addr %s263, 8
      %s265 = smul.addr %s264, 8
      %s266 = scalar_lea.vmem %s1, %s265
      %p267 = scmp.lt.s32.totalorder %s17, 1
      %s268 = scalar_select %p267, %s17, 1
      %s269 = smul.addr %s268, 8
      %s270 = smul.addr %s269, 8
      %s271 = scalar_lea.vmem %s6, %s270
      %v272 = vld [vmem:[%s266] sm:$0xff]
      %v273 = vld [vmem:[%s266 + $0x8] sm:$0xff]
      %v274 = vld [vmem:[%s266 + $0x10] sm:$0xff]
      %v275 = vld [vmem:[%s266 + $0x18] sm:$0xff]
      %v276 = vld [vmem:[%s266 + $0x20] sm:$0xff]
      %v277 = vld [vmem:[%s266 + $0x28] sm:$0xff]
      %v278 = vld [vmem:[%s266 + $0x30] sm:$0xff]
      %v279 = vld [vmem:[%s266 + $0x38] sm:$0xff]
      %v280 = vld [vmem:[%s261] sm:$0xff]
      %v281 = vld [vmem:[%s261 + $0x8] sm:$0xff]
      %v282 = vld [vmem:[%s2] sm:$0xff]
      %v283 = vld [vmem:[%s2 + $0x8] sm:$0xff]
      %v284 = vld [vmem:[%s2 + $0x10] sm:$0xff]
      %v285 = vld [vmem:[%s2 + $0x18] sm:$0xff]
      %vm286 = vcmask 261120
      %v288 = vsel %vm286, %v272, 0
      %v291 = vsel %vm286, %v273, 0
      %v294 = vsel %vm286, %v274, 0
      %v297 = vsel %vm286, %v275, 0
      %v300 = vsel %vm286, %v276, 0
      %v303 = vsel %vm286, %v277, 0
      %v306 = vsel %vm286, %v278, 0
      %v309 = vsel %vm286, %v279, 0
      %311 = vmatpush.msra.mxu0 0.0
      %312 = vmatpush.msra.mxu0 0.0
      %313 = vmatpush.msra.mxu0 0.0
      %314 = vmatpush.msra.mxu0 0.0
      %315 = vmatpush.msra.mxu0 0.0
      %316 = vmatpush.msra.mxu0 0.0
      %317 = vmatpush.msra.mxu0 0.0
      %318 = vmatpush.msra.mxu0 0.0
      %319 = vmatpush.msra.mxu0 0.0
      %320 = vmatpush.msra.mxu0 0.0
      %321 = vmatpush.msra.mxu0 0.0
      %322 = vmatpush.msra.mxu0 0.0
      %323 = vmatpush.msra.mxu0 %v285
      %324 = vmatpush.msra.mxu0 %v284
      %325 = vmatpush.msra.mxu0 %v283
      %326 = vmatpush.msra.mxu0 %v282
      %327 = vmatmul.f32.gmra.mxu0 %v288
      %v328 = vpop.f32.mrf.mxu0
      %v329 = vadd.f32 0.0, %v328
      %330 = vmatmul.f32.gmra.mxu0 %v291
      %v331 = vpop.f32.mrf.mxu0
      %v332 = vadd.f32 0.0, %v331
      %333 = vmatmul.f32.gmra.mxu0 %v294
      %v334 = vpop.f32.mrf.mxu0
      %v335 = vadd.f32 0.0, %v334
      %336 = vmatmul.f32.gmra.mxu0 %v297
      %v337 = vpop.f32.mrf.mxu0
      %v338 = vadd.f32 0.0, %v337
      %339 = vmatmul.f32.gmra.mxu0 %v300
      %v340 = vpop.f32.mrf.mxu0
      %v341 = vadd.f32 0.0, %v340
      %342 = vmatmul.f32.gmra.mxu0 %v303
      %v343 = vpop.f32.mrf.mxu0
      %v344 = vadd.f32 0.0, %v343
      %345 = vmatmul.f32.gmra.mxu0 %v306
      %v346 = vpop.f32.mrf.mxu0
      %v347 = vadd.f32 0.0, %v346
      %348 = vmatmul.f32.gmra.mxu0 %v309
      %v349 = vpop.f32.mrf.mxu0
      %v350 = vadd.f32 0.0, %v349
      %351 = vdwg.mxu0
      %360 = vrot.lane.b32.xlu0 %v329, 96
      %v361 = vpop.permute.xlu0 %360
      %362 = vrot.lane.b32.xlu0 %v332, 96
      %v363 = vpop.permute.xlu0 %362
      %364 = vrot.lane.b32.xlu0 %v335, 96
      %v365 = vpop.permute.xlu0 %364
      %366 = vrot.lane.b32.xlu0 %v338, 96
      %v367 = vpop.permute.xlu0 %366
      %368 = vrot.lane.b32.xlu0 %v341, 96
      %v369 = vpop.permute.xlu0 %368
      %370 = vrot.lane.b32.xlu0 %v344, 96
      %v371 = vpop.permute.xlu0 %370
      %372 = vrot.lane.b32.xlu0 %v347, 96
      %v373 = vpop.permute.xlu0 %372
      %374 = vrot.lane.b32.xlu0 %v350, 96
      %v375 = vpop.permute.xlu0 %374
      %384 = vxpose.xlu0.b32.start [1/16] %v361, 128
      %385 = vxpose.xlu0.b32.cont [2/16] %v363, 128
      %386 = vxpose.xlu0.b32.cont [3/16] %v365, 128
      %387 = vxpose.xlu0.b32.cont [4/16] %v367, 128
      %388 = vxpose.xlu0.b32.cont [5/16] %v369, 128
      %389 = vxpose.xlu0.b32.cont [6/16] %v371, 128
      %390 = vxpose.xlu0.b32.cont [7/16] %v373, 128
      %391 = vxpose.xlu0.b32.cont [8/16] %v375, 128
      %392 = vxpose.xlu0.b32.cont [9/16] 0.0, 128
      %393 = vxpose.xlu0.b32.cont [10/16] 0.0, 128
      %394 = vxpose.xlu0.b32.cont [11/16] 0.0, 128
      %395 = vxpose.xlu0.b32.cont [12/16] 0.0, 128
      %396 = vxpose.xlu0.b32.cont [13/16] 0.0, 128
      %397 = vxpose.xlu0.b32.cont [14/16] 0.0, 128
      %398 = vxpose.xlu0.b32.cont [15/16] 0.0, 128
      %399 = vxpose.xlu0.b32.end [16/16] 0.0, 128
      %v400 = vpop.trf.xlu0
      %v401 = vpop.trf.xlu0
      %v402 = vpop.trf.xlu0
      %v403 = vpop.trf.xlu0
      %v404 = vpop.trf.xlu0
      %v405 = vpop.trf.xlu0
      %v406 = vpop.trf.xlu0
      %v407 = vpop.trf.xlu0
      %v408 = vpop.trf.xlu0
      %v409 = vpop.trf.xlu0
      %v410 = vpop.trf.xlu0
      %v411 = vpop.trf.xlu0
      %v412 = vpop.trf.xlu0
      %v413 = vpop.trf.xlu0
      %v414 = vpop.trf.xlu0
      %v415 = vpop.trf.xlu0
      %vm416 = vcmask 523264
      %v418 = vsel %vm416, %v400, 0
      %v421 = vsel %vm416, %v401, 0
      %v424 = vsel %vm416, %v402, 0
      %v427 = vsel %vm416, %v403, 0
      %429 = vmatpush.msra.mxu0 0.0
      %430 = vmatpush.msra.mxu0 0.0
      %431 = vmatpush.msra.mxu0 0.0
      %432 = vmatpush.msra.mxu0 0.0
      %433 = vmatpush.msra.mxu0 0.0
      %434 = vmatpush.msra.mxu0 0.0
      %435 = vmatpush.msra.mxu0 0.0
      %436 = vmatpush.msra.mxu0 0.0
      %437 = vmatpush.msra.mxu0 %v350
      %438 = vmatpush.msra.mxu0 %v347
      %439 = vmatpush.msra.mxu0 %v344
      %440 = vmatpush.msra.mxu0 %v341
      %441 = vmatpush.msra.mxu0 %v338
      %442 = vmatpush.msra.mxu0 %v335
      %443 = vmatpush.msra.mxu0 %v332
      %444 = vmatpush.msra.mxu0 %v329
      %445 = vmatmul.f32.gmra.mxu0 %v418
      %v446 = vpop.f32.mrf.mxu0
      %v447 = vadd.f32 0.0, %v446
      %448 = vmatmul.f32.gmra.mxu0 %v421
      %v449 = vpop.f32.mrf.mxu0
      %v450 = vadd.f32 0.0, %v449
      %451 = vmatmul.f32.gmra.mxu0 %v424
      %v452 = vpop.f32.mrf.mxu0
      %v453 = vadd.f32 0.0, %v452
      %454 = vmatmul.f32.gmra.mxu0 %v427
      %v455 = vpop.f32.mrf.mxu0
      %v456 = vadd.f32 0.0, %v455
      %457 = vdwg.mxu0
      %v458 = vmul.f32 %v447, 0.35355338
      %v459 = vmul.f32 %v450, 0.35355338
      %v460 = vmul.f32 %v453, 0.35355338
      %v461 = vmul.f32 %v456, 0.35355338
      %v462 = vld [vmem:[%s3] sm:$0xff]
      %v463 = vld [vmem:[%s3 + $0x8] sm:$0xff]
      %v464 = vld [vmem:[%s3 + $0x10] sm:$0xff]
      %v465 = vld [vmem:[%s3 + $0x18] sm:$0xff]
      %v466 = vld [vmem:[%s3 + $0x20] sm:$0xff]
      %v467 = vld [vmem:[%s3 + $0x28] sm:$0xff]
      %v468 = vld [vmem:[%s3 + $0x30] sm:$0xff]
      %v469 = vld [vmem:[%s3 + $0x38] sm:$0xff]
      %v470 = vld [vmem:[%s3 + $0x40] sm:$0xff]
      %v471 = vld [vmem:[%s3 + $0x48] sm:$0xff]
      %v472 = vld [vmem:[%s3 + $0x50] sm:$0xff]
      %v473 = vld [vmem:[%s3 + $0x58] sm:$0xff]
      %v474 = vld [vmem:[%s3 + $0x60] sm:$0xff]
      %v475 = vld [vmem:[%s3 + $0x68] sm:$0xff]
      %v476 = vld [vmem:[%s3 + $0x70] sm:$0xff]
      %v477 = vld [vmem:[%s3 + $0x78] sm:$0xff]
      %478 = vmatpush.msra.mxu0 %v477
      %479 = vmatpush.msra.mxu0 %v476
      %480 = vmatpush.msra.mxu0 %v475
      %481 = vmatpush.msra.mxu0 %v474
      %482 = vmatpush.msra.mxu0 %v473
      %483 = vmatpush.msra.mxu0 %v472
      %484 = vmatpush.msra.mxu0 %v471
      %485 = vmatpush.msra.mxu0 %v470
      %486 = vmatpush.msra.mxu0 %v469
      %487 = vmatpush.msra.mxu0 %v468
      %488 = vmatpush.msra.mxu0 %v467
      %489 = vmatpush.msra.mxu0 %v466
      %490 = vmatpush.msra.mxu0 %v465
      %491 = vmatpush.msra.mxu0 %v464
      %492 = vmatpush.msra.mxu0 %v463
      %493 = vmatpush.msra.mxu0 %v462
      %494 = vmatmul.f32.gmra.mxu0 %v280
      %v495 = vpop.f32.mrf.mxu0
      %v496 = vadd.f32 0.0, %v495
      %497 = vmatmul.f32.gmra.mxu0 %v281
      %v498 = vpop.f32.mrf.mxu0
      %v499 = vadd.f32 0.0, %v498
      %500 = vdwg.mxu0
      %s501 = scalar_lea.vmem %s3, 128
      %v502 = vld [vmem:[%s501] sm:$0xff]
      %v503 = vld [vmem:[%s501 + $0x8] sm:$0xff]
      %v504 = vld [vmem:[%s501 + $0x10] sm:$0xff]
      %v505 = vld [vmem:[%s501 + $0x18] sm:$0xff]
      %v506 = vld [vmem:[%s501 + $0x20] sm:$0xff]
      %v507 = vld [vmem:[%s501 + $0x28] sm:$0xff]
      %v508 = vld [vmem:[%s501 + $0x30] sm:$0xff]
      %v509 = vld [vmem:[%s501 + $0x38] sm:$0xff]
      %v510 = vld [vmem:[%s501 + $0x40] sm:$0xff]
      %v511 = vld [vmem:[%s501 + $0x48] sm:$0xff]
      %v512 = vld [vmem:[%s501 + $0x50] sm:$0xff]
      %v513 = vld [vmem:[%s501 + $0x58] sm:$0xff]
      %v514 = vld [vmem:[%s501 + $0x60] sm:$0xff]
      %v515 = vld [vmem:[%s501 + $0x68] sm:$0xff]
      %v516 = vld [vmem:[%s501 + $0x70] sm:$0xff]
      %v517 = vld [vmem:[%s501 + $0x78] sm:$0xff]
      %518 = vmatpush.msra.mxu0 %v517
      %519 = vmatpush.msra.mxu0 %v516
      %520 = vmatpush.msra.mxu0 %v515
      %521 = vmatpush.msra.mxu0 %v514
      %522 = vmatpush.msra.mxu0 %v513
      %523 = vmatpush.msra.mxu0 %v512
      %524 = vmatpush.msra.mxu0 %v511
      %525 = vmatpush.msra.mxu0 %v510
      %526 = vmatpush.msra.mxu0 %v509
      %527 = vmatpush.msra.mxu0 %v508
      %528 = vmatpush.msra.mxu0 %v507
      %529 = vmatpush.msra.mxu0 %v506
      %530 = vmatpush.msra.mxu0 %v505
      %531 = vmatpush.msra.mxu0 %v504
      %532 = vmatpush.msra.mxu0 %v503
      %533 = vmatpush.msra.mxu0 %v502
      %534 = vmatmul.f32.gmra.mxu0 %v280
      %v535 = vpop.f32.mrf.mxu0
      %v536 = vadd.f32 0.0, %v535
      %537 = vmatmul.f32.gmra.mxu0 %v281
      %v538 = vpop.f32.mrf.mxu0
      %v539 = vadd.f32 0.0, %v538
      %540 = vdwg.mxu0
      %vm541 = vcmask 64512
      %v542 = vsel %vm541, %v458, -inf
      %v543 = vrot.slane %v542, 4
      %v544 = vmax.f32 %v542, %v543
      %v545 = vrot.slane %v544, 2
      %v546 = vmax.f32 %v544, %v545
      %v547 = vrot.slane %v546, 1
      %v548 = vmax.f32 %v546, %v547
      %v549 = vsub.f32 %v458, %v548
      %v550 = vmul.f32 %v549, 1.442695
      %v551 = vpow.pop %v550
      %v552 = vsel %vm541, %v551, 0.0
      %v553 = vrot.slane %v552, 4
      %v554 = vadd.f32 %v552, %v553
      %v555 = vrot.slane %v554, 2
      %v556 = vadd.f32 %v554, %v555
      %v557 = vrot.slane %v556, 1
      %v558 = vadd.f32 %v556, %v557
      %v559 = vrcp.pop %v558
      %v560 = vmul.f32 %v551, %v559
      %v562 = vsel %vm541, %v496, 0
      %v565 = vsel %vm541, %v499, 0
      %567 = vmatpush.msra.mxu0 0.0
      %568 = vmatpush.msra.mxu0 0.0
      %569 = vmatpush.msra.mxu0 0.0
      %570 = vmatpush.msra.mxu0 0.0
      %571 = vmatpush.msra.mxu0 0.0
      %572 = vmatpush.msra.mxu0 0.0
      %573 = vmatpush.msra.mxu0 0.0
      %574 = vmatpush.msra.mxu0 0.0
      %575 = vmatpush.msra.mxu0 0.0
      %576 = vmatpush.msra.mxu0 0.0
      %577 = vmatpush.msra.mxu0 0.0
      %578 = vmatpush.msra.mxu0 0.0
      %579 = vmatpush.msra.mxu0 0.0
      %580 = vmatpush.msra.mxu0 0.0
      %581 = vmatpush.msra.mxu0 0.0
      %582 = vmatpush.msra.mxu0 %v560
      %583 = vmatmul.f32.gmra.mxu0 %v562
      %v584 = vpop.f32.mrf.mxu0
      %v585 = vadd.f32 0.0, %v584
      %586 = vmatmul.f32.gmra.mxu0 %v565
      %v587 = vpop.f32.mrf.mxu0
      %v588 = vadd.f32 0.0, %v587
      %589 = vdwg.mxu0
      %590 = vst.msk [vmem:[#allocation2] sm:$0xff] %vm541, %v585
      %591 = vst.msk [vmem:[#allocation2 + $0x8] sm:$0xff] %vm541, %v588
      %592 = vrot.lane.b32.xlu0 %v496, 120
      %v593 = vpop.permute.xlu0 %592
      %594 = vrot.lane.b32.xlu0 %v499, 120
      %v595 = vpop.permute.xlu0 %594
      %v596 = vsel %vm541, %v593, 0
      %v598 = vsel %vm541, %v595, 0
      %600 = vmatpush.msra.mxu0 0.0
      %601 = vmatpush.msra.mxu0 0.0
      %602 = vmatpush.msra.mxu0 0.0
      %603 = vmatpush.msra.mxu0 0.0
      %604 = vmatpush.msra.mxu0 0.0
      %605 = vmatpush.msra.mxu0 0.0
      %606 = vmatpush.msra.mxu0 0.0
      %607 = vmatpush.msra.mxu0 0.0
      %608 = vmatpush.msra.mxu0 0.0
      %609 = vmatpush.msra.mxu0 0.0
      %610 = vmatpush.msra.mxu0 0.0
      %611 = vmatpush.msra.mxu0 0.0
      %612 = vmatpush.msra.mxu0 0.0
      %613 = vmatpush.msra.mxu0 0.0
      %614 = vmatpush.msra.mxu0 0.0
      %615 = vmatpush.msra.mxu0 %v560
      %616 = vmatmul.f32.gmra.mxu0 %v596
      %v617 = vpop.f32.mrf.mxu0
      %v618 = vadd.f32 0.0, %v617
      %619 = vmatmul.f32.gmra.mxu0 %v598
      %v620 = vpop.f32.mrf.mxu0
      %v621 = vadd.f32 0.0, %v620
      %622 = vdwg.mxu0
      %625 = vrot.lane.b32.xlu0 %v618, 8
      %v626 = vpop.permute.xlu0 %625
      %627 = vrot.lane.b32.xlu0 %v621, 8
      %v628 = vpop.permute.xlu0 %627
      %vm631 = vcmask 130112
      %632 = vst.msk [vmem:[#allocation2] sm:$0xff] %vm631, %v626
      %633 = vst.msk [vmem:[#allocation2 + $0x8] sm:$0xff] %vm631, %v628
      %634 = vrot.lane.b32.xlu0 %v496, 112
      %v635 = vpop.permute.xlu0 %634
      %636 = vrot.lane.b32.xlu0 %v499, 112
      %v637 = vpop.permute.xlu0 %636
      %v638 = vsel %vm541, %v635, 0
      %v640 = vsel %vm541, %v637, 0
      %642 = vmatpush.msra.mxu0 0.0
      %643 = vmatpush.msra.mxu0 0.0
      %644 = vmatpush.msra.mxu0 0.0
      %645 = vmatpush.msra.mxu0 0.0
      %646 = vmatpush.msra.mxu0 0.0
      %647 = vmatpush.msra.mxu0 0.0
      %648 = vmatpush.msra.mxu0 0.0
      %649 = vmatpush.msra.mxu0 0.0
      %650 = vmatpush.msra.mxu0 0.0
      %651 = vmatpush.msra.mxu0 0.0
      %652 = vmatpush.msra.mxu0 0.0
      %653 = vmatpush.msra.mxu0 0.0
      %654 = vmatpush.msra.mxu0 0.0
      %655 = vmatpush.msra.mxu0 0.0
      %656 = vmatpush.msra.mxu0 0.0
      %657 = vmatpush.msra.mxu0 %v560
      %658 = vmatmul.f32.gmra.mxu0 %v638
      %v659 = vpop.f32.mrf.mxu0
      %v660 = vadd.f32 0.0, %v659
      %661 = vmatmul.f32.gmra.mxu0 %v640
      %v662 = vpop.f32.mrf.mxu0
      %v663 = vadd.f32 0.0, %v662
      %664 = vdwg.mxu0
      %667 = vrot.lane.b32.xlu0 %v660, 16
      %v668 = vpop.permute.xlu0 %667
      %669 = vrot.lane.b32.xlu0 %v663, 16
      %v670 = vpop.permute.xlu0 %669
      %vm673 = vcmask 195712
      %674 = vst.msk [vmem:[#allocation2] sm:$0xff] %vm673, %v668
      %675 = vst.msk [vmem:[#allocation2 + $0x8] sm:$0xff] %vm673, %v670
      %676 = vrot.lane.b32.xlu0 %v496, 104
      %v677 = vpop.permute.xlu0 %676
      %678 = vrot.lane.b32.xlu0 %v499, 104
      %v679 = vpop.permute.xlu0 %678
      %v680 = vsel %vm541, %v677, 0
      %v682 = vsel %vm541, %v679, 0
      %684 = vmatpush.msra.mxu0 0.0
      %685 = vmatpush.msra.mxu0 0.0
      %686 = vmatpush.msra.mxu0 0.0
      %687 = vmatpush.msra.mxu0 0.0
      %688 = vmatpush.msra.mxu0 0.0
      %689 = vmatpush.msra.mxu0 0.0
      %690 = vmatpush.msra.mxu0 0.0
      %691 = vmatpush.msra.mxu0 0.0
      %692 = vmatpush.msra.mxu0 0.0
      %693 = vmatpush.msra.mxu0 0.0
      %694 = vmatpush.msra.mxu0 0.0
      %695 = vmatpush.msra.mxu0 0.0
      %696 = vmatpush.msra.mxu0 0.0
      %697 = vmatpush.msra.mxu0 0.0
      %698 = vmatpush.msra.mxu0 0.0
      %699 = vmatpush.msra.mxu0 %v560
      %700 = vmatmul.f32.gmra.mxu0 %v680
      %v701 = vpop.f32.mrf.mxu0
      %v702 = vadd.f32 0.0, %v701
      %703 = vmatmul.f32.gmra.mxu0 %v682
      %v704 = vpop.f32.mrf.mxu0
      %v705 = vadd.f32 0.0, %v704
      %706 = vdwg.mxu0
      %709 = vrot.lane.b32.xlu0 %v702, 24
      %v710 = vpop.permute.xlu0 %709
      %711 = vrot.lane.b32.xlu0 %v705, 24
      %v712 = vpop.permute.xlu0 %711
      %vm715 = vcmask 261312
      %716 = vst.msk [vmem:[#allocation2] sm:$0xff] %vm715, %v710
      %717 = vst.msk [vmem:[#allocation2 + $0x8] sm:$0xff] %vm715, %v712
      %v718 = vsel %vm673, %v460, -inf
      %v719 = vrot.slane %v718, 4
      %v720 = vmax.f32 %v718, %v719
      %v721 = vrot.slane %v720, 2
      %v722 = vmax.f32 %v720, %v721
      %v723 = vrot.slane %v722, 1
      %v724 = vmax.f32 %v722, %v723
      %v725 = vsub.f32 %v460, %v724
      %v726 = vmul.f32 %v725, 1.442695
      %v727 = vpow.pop %v726
      %v728 = vsel %vm673, %v727, 0.0
      %v729 = vrot.slane %v728, 4
      %v730 = vadd.f32 %v728, %v729
      %v731 = vrot.slane %v730, 2
      %v732 = vadd.f32 %v730, %v731
      %v733 = vrot.slane %v732, 1
      %v734 = vadd.f32 %v732, %v733
      %v735 = vrcp.pop %v734
      %v736 = vmul.f32 %v727, %v735
      %738 = vrot.lane.b32.xlu0 %v736, 112
      %v739 = vpop.permute.xlu0 %738
      %v742 = vsel %vm541, %v536, 0
      %v745 = vsel %vm541, %v539, 0
      %747 = vmatpush.msra.mxu0 0.0
      %748 = vmatpush.msra.mxu0 0.0
      %749 = vmatpush.msra.mxu0 0.0
      %750 = vmatpush.msra.mxu0 0.0
      %751 = vmatpush.msra.mxu0 0.0
      %752 = vmatpush.msra.mxu0 0.0
      %753 = vmatpush.msra.mxu0 0.0
      %754 = vmatpush.msra.mxu0 0.0
      %755 = vmatpush.msra.mxu0 0.0
      %756 = vmatpush.msra.mxu0 0.0
      %757 = vmatpush.msra.mxu0 0.0
      %758 = vmatpush.msra.mxu0 0.0
      %759 = vmatpush.msra.mxu0 0.0
      %760 = vmatpush.msra.mxu0 0.0
      %761 = vmatpush.msra.mxu0 0.0
      %762 = vmatpush.msra.mxu0 %v739
      %763 = vmatmul.f32.gmra.mxu0 %v742
      %v764 = vpop.f32.mrf.mxu0
      %v765 = vadd.f32 0.0, %v764
      %766 = vmatmul.f32.gmra.mxu0 %v745
      %v767 = vpop.f32.mrf.mxu0
      %v768 = vadd.f32 0.0, %v767
      %769 = vdwg.mxu0
      %770 = vst.msk [vmem:[#allocation2 + $0x10] sm:$0xff] %vm541, %v765
      %771 = vst.msk [vmem:[#allocation2 + $0x18] sm:$0xff] %vm541, %v768
      %772 = vrot.lane.b32.xlu0 %v536, 120
      %v773 = vpop.permute.xlu0 %772
      %774 = vrot.lane.b32.xlu0 %v539, 120
      %v775 = vpop.permute.xlu0 %774
      %v776 = vsel %vm541, %v773, 0
      %v778 = vsel %vm541, %v775, 0
      %780 = vmatpush.msra.mxu0 0.0
      %781 = vmatpush.msra.mxu0 0.0
      %782 = vmatpush.msra.mxu0 0.0
      %783 = vmatpush.msra.mxu0 0.0
      %784 = vmatpush.msra.mxu0 0.0
      %785 = vmatpush.msra.mxu0 0.0
      %786 = vmatpush.msra.mxu0 0.0
      %787 = vmatpush.msra.mxu0 0.0
      %788 = vmatpush.msra.mxu0 0.0
      %789 = vmatpush.msra.mxu0 0.0
      %790 = vmatpush.msra.mxu0 0.0
      %791 = vmatpush.msra.mxu0 0.0
      %792 = vmatpush.msra.mxu0 0.0
      %793 = vmatpush.msra.mxu0 0.0
      %794 = vmatpush.msra.mxu0 0.0
      %795 = vmatpush.msra.mxu0 %v739
      %796 = vmatmul.f32.gmra.mxu0 %v776
      %v797 = vpop.f32.mrf.mxu0
      %v798 = vadd.f32 0.0, %v797
      %799 = vmatmul.f32.gmra.mxu0 %v778
      %v800 = vpop.f32.mrf.mxu0
      %v801 = vadd.f32 0.0, %v800
      %802 = vdwg.mxu0
      %805 = vrot.lane.b32.xlu0 %v798, 8
      %v806 = vpop.permute.xlu0 %805
      %807 = vrot.lane.b32.xlu0 %v801, 8
      %v808 = vpop.permute.xlu0 %807
      %811 = vst.msk [vmem:[#allocation2 + $0x10] sm:$0xff] %vm631, %v806
      %812 = vst.msk [vmem:[#allocation2 + $0x18] sm:$0xff] %vm631, %v808
      %813 = vrot.lane.b32.xlu0 %v536, 112
      %v814 = vpop.permute.xlu0 %813
      %815 = vrot.lane.b32.xlu0 %v539, 112
      %v816 = vpop.permute.xlu0 %815
      %v817 = vsel %vm541, %v814, 0
      %v819 = vsel %vm541, %v816, 0
      %821 = vmatpush.msra.mxu0 0.0
      %822 = vmatpush.msra.mxu0 0.0
      %823 = vmatpush.msra.mxu0 0.0
      %824 = vmatpush.msra.mxu0 0.0
      %825 = vmatpush.msra.mxu0 0.0
      %826 = vmatpush.msra.mxu0 0.0
      %827 = vmatpush.msra.mxu0 0.0
      %828 = vmatpush.msra.mxu0 0.0
      %829 = vmatpush.msra.mxu0 0.0
      %830 = vmatpush.msra.mxu0 0.0
      %831 = vmatpush.msra.mxu0 0.0
      %832 = vmatpush.msra.mxu0 0.0
      %833 = vmatpush.msra.mxu0 0.0
      %834 = vmatpush.msra.mxu0 0.0
      %835 = vmatpush.msra.mxu0 0.0
      %836 = vmatpush.msra.mxu0 %v739
      %837 = vmatmul.f32.gmra.mxu0 %v817
      %v838 = vpop.f32.mrf.mxu0
      %v839 = vadd.f32 0.0, %v838
      %840 = vmatmul.f32.gmra.mxu0 %v819
      %v841 = vpop.f32.mrf.mxu0
      %v842 = vadd.f32 0.0, %v841
      %843 = vdwg.mxu0
      %846 = vrot.lane.b32.xlu0 %v839, 16
      %v847 = vpop.permute.xlu0 %846
      %848 = vrot.lane.b32.xlu0 %v842, 16
      %v849 = vpop.permute.xlu0 %848
      %852 = vst.msk [vmem:[#allocation2 + $0x10] sm:$0xff] %vm673, %v847
      %853 = vst.msk [vmem:[#allocation2 + $0x18] sm:$0xff] %vm673, %v849
      %854 = vrot.lane.b32.xlu0 %v536, 104
      %v855 = vpop.permute.xlu0 %854
      %856 = vrot.lane.b32.xlu0 %v539, 104
      %v857 = vpop.permute.xlu0 %856
      %v858 = vsel %vm541, %v855, 0
      %v860 = vsel %vm541, %v857, 0
      %862 = vmatpush.msra.mxu0 0.0
      %863 = vmatpush.msra.mxu0 0.0
      %864 = vmatpush.msra.mxu0 0.0
      %865 = vmatpush.msra.mxu0 0.0
      %866 = vmatpush.msra.mxu0 0.0
      %867 = vmatpush.msra.mxu0 0.0
      %868 = vmatpush.msra.mxu0 0.0
      %869 = vmatpush.msra.mxu0 0.0
      %870 = vmatpush.msra.mxu0 0.0
      %871 = vmatpush.msra.mxu0 0.0
      %872 = vmatpush.msra.mxu0 0.0
      %873 = vmatpush.msra.mxu0 0.0
      %874 = vmatpush.msra.mxu0 0.0
      %875 = vmatpush.msra.mxu0 0.0
      %876 = vmatpush.msra.mxu0 0.0
      %877 = vmatpush.msra.mxu0 %v739
      %878 = vmatmul.f32.gmra.mxu0 %v858
      %v879 = vpop.f32.mrf.mxu0
      %v880 = vadd.f32 0.0, %v879
      %881 = vmatmul.f32.gmra.mxu0 %v860
      %v882 = vpop.f32.mrf.mxu0
      %v883 = vadd.f32 0.0, %v882
      %884 = vdwg.mxu0
      %887 = vrot.lane.b32.xlu0 %v880, 24
      %v888 = vpop.permute.xlu0 %887
      %889 = vrot.lane.b32.xlu0 %v883, 24
      %v890 = vpop.permute.xlu0 %889
      %893 = vst.msk [vmem:[#allocation2 + $0x10] sm:$0xff] %vm715, %v888
      %894 = vst.msk [vmem:[#allocation2 + $0x18] sm:$0xff] %vm715, %v890
      %v895 = vsel %vm631, %v459, -inf
      %v896 = vrot.slane %v895, 4
      %v897 = vmax.f32 %v895, %v896
      %v898 = vrot.slane %v897, 2
      %v899 = vmax.f32 %v897, %v898
      %v900 = vrot.slane %v899, 1
      %v901 = vmax.f32 %v899, %v900
      %v902 = vsub.f32 %v459, %v901
      %v903 = vmul.f32 %v902, 1.442695
      %v904 = vpow.pop %v903
      %v905 = vsel %vm631, %v904, 0.0
      %v906 = vrot.slane %v905, 4
      %v907 = vadd.f32 %v905, %v906
      %v908 = vrot.slane %v907, 2
      %v909 = vadd.f32 %v907, %v908
      %v910 = vrot.slane %v909, 1
      %v911 = vadd.f32 %v909, %v910
      %v912 = vrcp.pop %v911
      %v913 = vmul.f32 %v904, %v912
      %915 = vrot.lane.b32.xlu0 %v913, 120
      %v916 = vpop.permute.xlu0 %915
      %918 = vmatpush.msra.mxu0 0.0
      %919 = vmatpush.msra.mxu0 0.0
      %920 = vmatpush.msra.mxu0 0.0
      %921 = vmatpush.msra.mxu0 0.0
      %922 = vmatpush.msra.mxu0 0.0
      %923 = vmatpush.msra.mxu0 0.0
      %924 = vmatpush.msra.mxu0 0.0
      %925 = vmatpush.msra.mxu0 0.0
      %926 = vmatpush.msra.mxu0 0.0
      %927 = vmatpush.msra.mxu0 0.0
      %928 = vmatpush.msra.mxu0 0.0
      %929 = vmatpush.msra.mxu0 0.0
      %930 = vmatpush.msra.mxu0 0.0
      %931 = vmatpush.msra.mxu0 0.0
      %932 = vmatpush.msra.mxu0 0.0
      %933 = vmatpush.msra.mxu0 %v916
      %934 = vmatmul.f32.gmra.mxu0 %v562
      %v935 = vpop.f32.mrf.mxu0
      %v936 = vadd.f32 0.0, %v935
      %937 = vmatmul.f32.gmra.mxu0 %v565
      %v938 = vpop.f32.mrf.mxu0
      %v939 = vadd.f32 0.0, %v938
      %940 = vdwg.mxu0
      %941 = vst.msk [vmem:[#allocation2 + $0x20] sm:$0xff] %vm541, %v936
      %942 = vst.msk [vmem:[#allocation2 + $0x28] sm:$0xff] %vm541, %v939
      %943 = vmatpush.msra.mxu0 0.0
      %944 = vmatpush.msra.mxu0 0.0
      %945 = vmatpush.msra.mxu0 0.0
      %946 = vmatpush.msra.mxu0 0.0
      %947 = vmatpush.msra.mxu0 0.0
      %948 = vmatpush.msra.mxu0 0.0
      %949 = vmatpush.msra.mxu0 0.0
      %950 = vmatpush.msra.mxu0 0.0
      %951 = vmatpush.msra.mxu0 0.0
      %952 = vmatpush.msra.mxu0 0.0
      %953 = vmatpush.msra.mxu0 0.0
      %954 = vmatpush.msra.mxu0 0.0
      %955 = vmatpush.msra.mxu0 0.0
      %956 = vmatpush.msra.mxu0 0.0
      %957 = vmatpush.msra.mxu0 0.0
      %958 = vmatpush.msra.mxu0 %v916
      %959 = vmatmul.f32.gmra.mxu0 %v596
      %v960 = vpop.f32.mrf.mxu0
      %v961 = vadd.f32 0.0, %v960
      %962 = vmatmul.f32.gmra.mxu0 %v598
      %v963 = vpop.f32.mrf.mxu0
      %v964 = vadd.f32 0.0, %v963
      %965 = vdwg.mxu0
      %968 = vrot.lane.b32.xlu0 %v961, 8
      %v969 = vpop.permute.xlu0 %968
      %970 = vrot.lane.b32.xlu0 %v964, 8
      %v971 = vpop.permute.xlu0 %970
      %974 = vst.msk [vmem:[#allocation2 + $0x20] sm:$0xff] %vm631, %v969
      %975 = vst.msk [vmem:[#allocation2 + $0x28] sm:$0xff] %vm631, %v971
      %976 = vmatpush.msra.mxu0 0.0
      %977 = vmatpush.msra.mxu0 0.0
      %978 = vmatpush.msra.mxu0 0.0
      %979 = vmatpush.msra.mxu0 0.0
      %980 = vmatpush.msra.mxu0 0.0
      %981 = vmatpush.msra.mxu0 0.0
      %982 = vmatpush.msra.mxu0 0.0
      %983 = vmatpush.msra.mxu0 0.0
      %984 = vmatpush.msra.mxu0 0.0
      %985 = vmatpush.msra.mxu0 0.0
      %986 = vmatpush.msra.mxu0 0.0
      %987 = vmatpush.msra.mxu0 0.0
      %988 = vmatpush.msra.mxu0 0.0
      %989 = vmatpush.msra.mxu0 0.0
      %990 = vmatpush.msra.mxu0 0.0
      %991 = vmatpush.msra.mxu0 %v916
      %992 = vmatmul.f32.gmra.mxu0 %v638
      %v993 = vpop.f32.mrf.mxu0
      %v994 = vadd.f32 0.0, %v993
      %995 = vmatmul.f32.gmra.mxu0 %v640
      %v996 = vpop.f32.mrf.mxu0
      %v997 = vadd.f32 0.0, %v996
      %998 = vdwg.mxu0
      %1001 = vrot.lane.b32.xlu0 %v994, 16
      %v1002 = vpop.permute.xlu0 %1001
      %1003 = vrot.lane.b32.xlu0 %v997, 16
      %v1004 = vpop.permute.xlu0 %1003
      %1007 = vst.msk [vmem:[#allocation2 + $0x20] sm:$0xff] %vm673, %v1002
      %1008 = vst.msk [vmem:[#allocation2 + $0x28] sm:$0xff] %vm673, %v1004
      %1009 = vmatpush.msra.mxu0 0.0
      %1010 = vmatpush.msra.mxu0 0.0
      %1011 = vmatpush.msra.mxu0 0.0
      %1012 = vmatpush.msra.mxu0 0.0
      %1013 = vmatpush.msra.mxu0 0.0
      %1014 = vmatpush.msra.mxu0 0.0
      %1015 = vmatpush.msra.mxu0 0.0
      %1016 = vmatpush.msra.mxu0 0.0
      %1017 = vmatpush.msra.mxu0 0.0
      %1018 = vmatpush.msra.mxu0 0.0
      %1019 = vmatpush.msra.mxu0 0.0
      %1020 = vmatpush.msra.mxu0 0.0
      %1021 = vmatpush.msra.mxu0 0.0
      %1022 = vmatpush.msra.mxu0 0.0
      %1023 = vmatpush.msra.mxu0 0.0
      %1024 = vmatpush.msra.mxu0 %v916
      %1025 = vmatmul.f32.gmra.mxu0 %v680
      %v1026 = vpop.f32.mrf.mxu0
      %v1027 = vadd.f32 0.0, %v1026
      %1028 = vmatmul.f32.gmra.mxu0 %v682
      %v1029 = vpop.f32.mrf.mxu0
      %v1030 = vadd.f32 0.0, %v1029
      %1031 = vdwg.mxu0
      %1034 = vrot.lane.b32.xlu0 %v1027, 24
      %v1035 = vpop.permute.xlu0 %1034
      %1036 = vrot.lane.b32.xlu0 %v1030, 24
      %v1037 = vpop.permute.xlu0 %1036
      %1040 = vst.msk [vmem:[#allocation2 + $0x20] sm:$0xff] %vm715, %v1035
      %1041 = vst.msk [vmem:[#allocation2 + $0x28] sm:$0xff] %vm715, %v1037
      %v1042 = vsel %vm715, %v461, -inf
      %v1043 = vrot.slane %v1042, 4
      %v1044 = vmax.f32 %v1042, %v1043
      %v1045 = vrot.slane %v1044, 2
      %v1046 = vmax.f32 %v1044, %v1045
      %v1047 = vrot.slane %v1046, 1
      %v1048 = vmax.f32 %v1046, %v1047
      %v1049 = vsub.f32 %v461, %v1048
      %v1050 = vmul.f32 %v1049, 1.442695
      %v1051 = vpow.pop %v1050
      %v1052 = vsel %vm715, %v1051, 0.0
      %v1053 = vrot.slane %v1052, 4
      %v1054 = vadd.f32 %v1052, %v1053
      %v1055 = vrot.slane %v1054, 2
      %v1056 = vadd.f32 %v1054, %v1055
      %v1057 = vrot.slane %v1056, 1
      %v1058 = vadd.f32 %v1056, %v1057
      %v1059 = vrcp.pop %v1058
      %v1060 = vmul.f32 %v1051, %v1059
      %1062 = vrot.lane.b32.xlu0 %v1060, 104
      %v1063 = vpop.permute.xlu0 %1062
      %1065 = vmatpush.msra.mxu0 0.0
      %1066 = vmatpush.msra.mxu0 0.0
      %1067 = vmatpush.msra.mxu0 0.0
      %1068 = vmatpush.msra.mxu0 0.0
      %1069 = vmatpush.msra.mxu0 0.0
      %1070 = vmatpush.msra.mxu0 0.0
      %1071 = vmatpush.msra.mxu0 0.0
      %1072 = vmatpush.msra.mxu0 0.0
      %1073 = vmatpush.msra.mxu0 0.0
      %1074 = vmatpush.msra.mxu0 0.0
      %1075 = vmatpush.msra.mxu0 0.0
      %1076 = vmatpush.msra.mxu0 0.0
      %1077 = vmatpush.msra.mxu0 0.0
      %1078 = vmatpush.msra.mxu0 0.0
      %1079 = vmatpush.msra.mxu0 0.0
      %1080 = vmatpush.msra.mxu0 %v1063
      %1081 = vmatmul.f32.gmra.mxu0 %v742
      %v1082 = vpop.f32.mrf.mxu0
      %v1083 = vadd.f32 0.0, %v1082
      %1084 = vmatmul.f32.gmra.mxu0 %v745
      %v1085 = vpop.f32.mrf.mxu0
      %v1086 = vadd.f32 0.0, %v1085
      %1087 = vdwg.mxu0
      %1088 = vst.msk [vmem:[#allocation2 + $0x30] sm:$0xff] %vm541, %v1083
      %1089 = vst.msk [vmem:[#allocation2 + $0x38] sm:$0xff] %vm541, %v1086
      %1090 = vmatpush.msra.mxu0 0.0
      %1091 = vmatpush.msra.mxu0 0.0
      %1092 = vmatpush.msra.mxu0 0.0
      %1093 = vmatpush.msra.mxu0 0.0
      %1094 = vmatpush.msra.mxu0 0.0
      %1095 = vmatpush.msra.mxu0 0.0
      %1096 = vmatpush.msra.mxu0 0.0
      %1097 = vmatpush.msra.mxu0 0.0
      %1098 = vmatpush.msra.mxu0 0.0
      %1099 = vmatpush.msra.mxu0 0.0
      %1100 = vmatpush.msra.mxu0 0.0
      %1101 = vmatpush.msra.mxu0 0.0
      %1102 = vmatpush.msra.mxu0 0.0
      %1103 = vmatpush.msra.mxu0 0.0
      %1104 = vmatpush.msra.mxu0 0.0
      %1105 = vmatpush.msra.mxu0 %v1063
      %1106 = vmatmul.f32.gmra.mxu0 %v776
      %v1107 = vpop.f32.mrf.mxu0
      %v1108 = vadd.f32 0.0, %v1107
      %1109 = vmatmul.f32.gmra.mxu0 %v778
      %v1110 = vpop.f32.mrf.mxu0
      %v1111 = vadd.f32 0.0, %v1110
      %1112 = vdwg.mxu0
      %1115 = vrot.lane.b32.xlu0 %v1108, 8
      %v1116 = vpop.permute.xlu0 %1115
      %1117 = vrot.lane.b32.xlu0 %v1111, 8
      %v1118 = vpop.permute.xlu0 %1117
      %1121 = vst.msk [vmem:[#allocation2 + $0x30] sm:$0xff] %vm631, %v1116
      %1122 = vst.msk [vmem:[#allocation2 + $0x38] sm:$0xff] %vm631, %v1118
      %1123 = vmatpush.msra.mxu0 0.0
      %1124 = vmatpush.msra.mxu0 0.0
      %1125 = vmatpush.msra.mxu0 0.0
      %1126 = vmatpush.msra.mxu0 0.0
      %1127 = vmatpush.msra.mxu0 0.0
      %1128 = vmatpush.msra.mxu0 0.0
      %1129 = vmatpush.msra.mxu0 0.0
      %1130 = vmatpush.msra.mxu0 0.0
      %1131 = vmatpush.msra.mxu0 0.0
      %1132 = vmatpush.msra.mxu0 0.0
      %1133 = vmatpush.msra.mxu0 0.0
      %1134 = vmatpush.msra.mxu0 0.0
      %1135 = vmatpush.msra.mxu0 0.0
      %1136 = vmatpush.msra.mxu0 0.0
      %1137 = vmatpush.msra.mxu0 0.0
      %1138 = vmatpush.msra.mxu0 %v1063
      %1139 = vmatmul.f32.gmra.mxu0 %v817
      %v1140 = vpop.f32.mrf.mxu0
      %v1141 = vadd.f32 0.0, %v1140
      %1142 = vmatmul.f32.gmra.mxu0 %v819
      %v1143 = vpop.f32.mrf.mxu0
      %v1144 = vadd.f32 0.0, %v1143
      %1145 = vdwg.mxu0
      %1148 = vrot.lane.b32.xlu0 %v1141, 16
      %v1149 = vpop.permute.xlu0 %1148
      %1150 = vrot.lane.b32.xlu0 %v1144, 16
      %v1151 = vpop.permute.xlu0 %1150
      %1154 = vst.msk [vmem:[#allocation2 + $0x30] sm:$0xff] %vm673, %v1149
      %1155 = vst.msk [vmem:[#allocation2 + $0x38] sm:$0xff] %vm673, %v1151
      %1156 = vmatpush.msra.mxu0 0.0
      %1157 = vmatpush.msra.mxu0 0.0
      %1158 = vmatpush.msra.mxu0 0.0
      %1159 = vmatpush.msra.mxu0 0.0
      %1160 = vmatpush.msra.mxu0 0.0
      %1161 = vmatpush.msra.mxu0 0.0
      %1162 = vmatpush.msra.mxu0 0.0
      %1163 = vmatpush.msra.mxu0 0.0
      %1164 = vmatpush.msra.mxu0 0.0
      %1165 = vmatpush.msra.mxu0 0.0
      %1166 = vmatpush.msra.mxu0 0.0
      %1167 = vmatpush.msra.mxu0 0.0
      %1168 = vmatpush.msra.mxu0 0.0
      %1169 = vmatpush.msra.mxu0 0.0
      %1170 = vmatpush.msra.mxu0 0.0
      %1171 = vmatpush.msra.mxu0 %v1063
      %1172 = vmatmul.f32.gmra.mxu0 %v858
      %v1173 = vpop.f32.mrf.mxu0
      %v1174 = vadd.f32 0.0, %v1173
      %1175 = vmatmul.f32.gmra.mxu0 %v860
      %v1176 = vpop.f32.mrf.mxu0
      %v1177 = vadd.f32 0.0, %v1176
      %1178 = vdwg.mxu0
      %1181 = vrot.lane.b32.xlu0 %v1174, 24
      %v1182 = vpop.permute.xlu0 %1181
      %1183 = vrot.lane.b32.xlu0 %v1177, 24
      %v1184 = vpop.permute.xlu0 %1183
      %1187 = vst.msk [vmem:[#allocation2 + $0x30] sm:$0xff] %vm715, %v1182
      %1188 = vst.msk [vmem:[#allocation2 + $0x38] sm:$0xff] %vm715, %v1184
      %v1189 = vld [vmem:[#allocation2] sm:$0xff]
      %v1190 = vld [vmem:[#allocation2 + $0x8] sm:$0xff]
      %v1191 = vld [vmem:[#allocation2 + $0x10] sm:$0xff]
      %v1192 = vld [vmem:[#allocation2 + $0x18] sm:$0xff]
      %v1193 = vld [vmem:[#allocation2 + $0x20] sm:$0xff]
      %v1194 = vld [vmem:[#allocation2 + $0x28] sm:$0xff]
      %v1195 = vld [vmem:[#allocation2 + $0x30] sm:$0xff]
      %v1196 = vld [vmem:[#allocation2 + $0x38] sm:$0xff]
      %v1197 = vld [vmem:[%s4] sm:$0xff]
      %v1198 = vld [vmem:[%s4 + $0x8] sm:$0xff]
      %v1199 = vld [vmem:[%s4 + $0x10] sm:$0xff]
      %v1200 = vld [vmem:[%s4 + $0x18] sm:$0xff]
      %v1201 = vld [vmem:[%s5] sm:$0x1]
      %v1203 = vperm.slane %v1201, 0
      %v1206 = vsel %vm286, %v1189, 0
      %v1209 = vsel %vm286, %v1190, 0
      %v1212 = vsel %vm286, %v1191, 0
      %v1215 = vsel %vm286, %v1192, 0
      %v1218 = vsel %vm286, %v1193, 0
      %v1221 = vsel %vm286, %v1194, 0
      %v1224 = vsel %vm286, %v1195, 0
      %v1227 = vsel %vm286, %v1196, 0
      %1229 = vmatpush.msra.mxu0 0.0
      %1230 = vmatpush.msra.mxu0 0.0
      %1231 = vmatpush.msra.mxu0 0.0
      %1232 = vmatpush.msra.mxu0 0.0
      %1233 = vmatpush.msra.mxu0 0.0
      %1234 = vmatpush.msra.mxu0 0.0
      %1235 = vmatpush.msra.mxu0 0.0
      %1236 = vmatpush.msra.mxu0 0.0
      %1237 = vmatpush.msra.mxu0 0.0
      %1238 = vmatpush.msra.mxu0 0.0
      %1239 = vmatpush.msra.mxu0 0.0
      %1240 = vmatpush.msra.mxu0 0.0
      %1241 = vmatpush.msra.mxu0 %v1200
      %1242 = vmatpush.msra.mxu0 %v1199
      %1243 = vmatpush.msra.mxu0 %v1198
      %1244 = vmatpush.msra.mxu0 %v1197
      %1245 = vmatmul.f32.gmra.mxu0 %v1206
      %v1246 = vpop.f32.mrf.mxu0
      %v1247 = vadd.f32 %v1203, %v1246
      %1248 = vmatmul.f32.gmra.mxu0 %v1209
      %v1249 = vpop.f32.mrf.mxu0
      %v1250 = vadd.f32 %v1203, %v1249
      %1251 = vmatmul.f32.gmra.mxu0 %v1212
      %v1252 = vpop.f32.mrf.mxu0
      %v1253 = vadd.f32 %v1203, %v1252
      %1254 = vmatmul.f32.gmra.mxu0 %v1215
      %v1255 = vpop.f32.mrf.mxu0
      %v1256 = vadd.f32 %v1203, %v1255
      %1257 = vmatmul.f32.gmra.mxu0 %v1218
      %v1258 = vpop.f32.mrf.mxu0
      %v1259 = vadd.f32 %v1203, %v1258
      %1260 = vmatmul.f32.gmra.mxu0 %v1221
      %v1261 = vpop.f32.mrf.mxu0
      %v1262 = vadd.f32 %v1203, %v1261
      %1263 = vmatmul.f32.gmra.mxu0 %v1224
      %v1264 = vpop.f32.mrf.mxu0
      %v1265 = vadd.f32 %v1203, %v1264
      %1266 = vmatmul.f32.gmra.mxu0 %v1227
      %v1267 = vpop.f32.mrf.mxu0
      %v1268 = vadd.f32 %v1203, %v1267
      %1269 = vdwg.mxu0
      %1270 = vst.msk [vmem:[%s271] sm:$0xff] %vm286, %v1247
      %1271 = vst.msk [vmem:[%s271 + $0x8] sm:$0xff] %vm286, %v1250
      %1272 = vst.msk [vmem:[%s271 + $0x10] sm:$0xff] %vm286, %v1253
      %1273 = vst.msk [vmem:[%s271 + $0x18] sm:$0xff] %vm286, %v1256
      %1274 = vst.msk [vmem:[%s271 + $0x20] sm:$0xff] %vm286, %v1259
      %1275 = vst.msk [vmem:[%s271 + $0x28] sm:$0xff] %vm286, %v1262
      %1276 = vst.msk [vmem:[%s271 + $0x30] sm:$0xff] %vm286, %v1265
      %1277 = vst.msk [vmem:[%s271 + $0x38] sm:$0xff] %vm286, %v1268
      %p1278 = scmp.lt.s32.totalorder %s17, 1
      %s1279 = scalar_select %p1278, %s17, 1
      %s1280 = smul.addr %s1279, 8
      %s1281 = smul.addr %s1280, 8
      %s1282 = scalar_lea.vmem %s6, %s1281
      // Predicated region
      $region45: #{tpu_custom_call.1} parent=43 // pred_check
        %p1283 = pneg %p171
      $region46: #{tpu_custom_call.1} parent=43 // pred_check_branch
        %1285 = sbr.rel (%p1283) target = $region48
      $region47: #{tpu_custom_call.1} parent=43 // pred_region
        _
      $region48: #{tpu_custom_call.1} parent=43 // pred_fallthru
        _
    $region44: #{tpu_custom_call.1} parent=5 // pred_fallthru
      _
    %p1286 = scmp.le.s32.totalorder 2, %s12
    // Predicated region
    $region49: #{tpu_custom_call.1} parent=5 // pred_check
      %p1287 = pneg %p1286
    $region50: #{tpu_custom_call.1} parent=5 // pred_check_branch
      %1289 = sbr.rel (%p1287) target = $region52
    $region51: #{tpu_custom_call.1} parent=5 // pred_region
      %s1290 = ssub.s32 %s12, 2
      // Predicated region
      $region53: #{tpu_custom_call.1} parent=51 // pred_check
        %p1291 = pneg %p177
      $region54: #{tpu_custom_call.1} parent=51 // pred_check_branch
        %1293 = sbr.rel (%p1291) target = $region56
      $region55: #{tpu_custom_call.1} parent=51 // pred_region
        %p1294 = scmp.lt.s32.totalorder %s18, 1
        %s1295 = scalar_select %p1294, %s18, 1
        %s1296 = smul.addr %s1295, 8
        %s1297 = smul.addr %s1296, 8
        %s1298 = scalar_lea.vmem %s6, %s1297
      $region56: #{tpu_custom_call.1} parent=51 // pred_fallthru
        _
    $region52: #{tpu_custom_call.1} parent=5 // pred_fallthru
      _
  $region6: #{tpu_custom_call.1} parent=0 // loop_footer
    %s16 = sadd.s32 1, %s12
  $region7: #{tpu_custom_call.1} parent=0 // loop_footer_branch
    %11 = sbr.rel target = $region3
  $region8: #{tpu_custom_call.1} parent=0 // loop_exit
    _

</llo_original>
